<compile_context>
chip_gen: v6e
topology: v6e:2x2x1
jax: 0.10.0
libtpu: 0.0.40
codegen_flags: <defaults>
</compile_context>

<pallas_src>
import functools

import jax
import jax.numpy as jnp
from jax import lax
from jax.experimental import pallas as pl
from jax.experimental.pallas import tpu as pltpu


# Row indices inside the packed small-vector slab (shape (8, 4E), f32).
_LN1_G, _LN1_B, _OUT_B, _LN2_G, _LN2_B, _FC2_B, _FC1_B, _IN_B = range(8)


def clip_layer_kernel(x_ref, in_w_ref, out_w_ref, fc1_w_ref, fc2_w_ref,
                      vec_ref, o_ref, *, n_head):
    x = x_ref[0].astype(jnp.float32)            # (S, E) residual path in f32
    S, E = x.shape
    d_head = E // n_head
    eps = 1e-5

    # Packed small vectors (static slices of the (8, 4E) slab).
    ln1_g = vec_ref[_LN1_G:_LN1_G + 1, :E]
    ln1_b = vec_ref[_LN1_B:_LN1_B + 1, :E]
    out_b = vec_ref[_OUT_B:_OUT_B + 1, :E]
    ln2_g = vec_ref[_LN2_G:_LN2_G + 1, :E]
    ln2_b = vec_ref[_LN2_B:_LN2_B + 1, :E]
    fc2_b = vec_ref[_FC2_B:_FC2_B + 1, :E]
    fc1_b = vec_ref[_FC1_B:_FC1_B + 1, :4 * E]
    in_b = vec_ref[_IN_B:_IN_B + 1, :3 * E]

    def layernorm(h, g, b):
        mu = jnp.mean(h, axis=-1, keepdims=True)
        var = jnp.mean((h - mu) ** 2, axis=-1, keepdims=True)
        return (h - mu) * lax.rsqrt(var + eps) * g + b

    # ---- block 1: LN -> causal multi-head self-attention -> residual ----
    h = layernorm(x, ln1_g, ln1_b)

    # Fused QKV projection: one (S,E)@(E,3E) matmul. 1/sqrt(d_head) is already
    # folded into the Q columns of in_w and the first E bias lanes (host side).
    qkv = jnp.dot(h.astype(jnp.bfloat16), in_w_ref[...],
                  preferred_element_type=jnp.float32) + in_b     # (S, 3E) f32
    qkv_bf = qkv.astype(jnp.bfloat16)

    row = lax.broadcasted_iota(jnp.int32, (S, S), 0)
    col = lax.broadcasted_iota(jnp.int32, (S, S), 1)
    causal = col <= row                          # mask strictly-upper triangle
    neg_big = jnp.float32(-1e30)

    head_outs = []
    for hi in range(n_head):
        q_sl = slice(hi * d_head, (hi + 1) * d_head)
        k_sl = slice(E + hi * d_head, E + (hi + 1) * d_head)
        v_sl = slice(2 * E + hi * d_head, 2 * E + (hi + 1) * d_head)
        qh, kh, vh = qkv_bf[:, q_sl], qkv_bf[:, k_sl], qkv_bf[:, v_sl]

        # Contract the last dim of both operands -> no XLU transpose of kh.
        scores = lax.dot_general(qh, kh, (((1,), (1,)), ((), ())),
                                 preferred_element_type=jnp.float32)
        scores = jnp.where(causal, scores, neg_big)
        scores = scores - jnp.max(scores, axis=-1, keepdims=True)
        p = jnp.exp(scores)
        denom = jnp.sum(p, axis=-1, keepdims=True)
        # Normalize AFTER the PV matmul: scales (S, d_head) not (S, S).
        head_out = jnp.dot(p.astype(jnp.bfloat16), vh,
                           preferred_element_type=jnp.float32)
        head_out = head_out * pl.reciprocal(denom, approx=True)
        head_outs.append(head_out.astype(jnp.bfloat16))

    # Concatenate along the lane axis in registers (no VMEM scratch round-trip),
    # then a single full-contraction out-projection.
    attn_bf = jnp.concatenate(head_outs, axis=-1)                # (S, E) bf16
    attn = jnp.dot(attn_bf, out_w_ref[...],
                   preferred_element_type=jnp.float32) + out_b
    x1 = attn + x

    # ---- block 2: LN -> Linear -> QuickGELU -> Linear -> residual ----
    # (f32 elementwise throughout: right choice on v5e which lacks bf16 VPU/EUP.)
    h2 = layernorm(x1, ln2_g, ln2_b)
    h2 = jnp.dot(h2.astype(jnp.bfloat16), fc1_w_ref[...],
                 preferred_element_type=jnp.float32) + fc1_b
    h2 = h2 * jax.nn.sigmoid(h2 * 1.702)                          # QuickGELU
    h2 = jnp.dot(h2.astype(jnp.bfloat16), fc2_w_ref[...],
                 preferred_element_type=jnp.float32) + fc2_b

    o_ref[0] = (h2 + x1).astype(o_ref.dtype)


def prepare_params(p, n_head):
    """Host-side prep: fold attn scale into Q columns, bf16 weights, pack vecs."""
    E = p["ln1_g"].shape[-1]
    d_head = E // n_head
    scale = float(d_head) ** -0.5
    bf = jnp.bfloat16
    W4 = 4 * E

    # Fused in_proj weight with 1/sqrt(d_head) folded into the Q columns.
    in_w = jnp.concatenate([p["in_w"][:, :E] * scale, p["in_w"][:, E:]], axis=1)
    in_b = jnp.concatenate([p["in_b"][0, :E] * scale, p["in_b"][0, E:]])

    def pad_row(v, width=W4):
        v = jnp.asarray(v, jnp.float32).reshape(-1)
        return jnp.pad(v, (0, width - v.shape[0]))

    # Packed small vectors: row order must match the _* constants above.
    vec_pack = jnp.stack([
        pad_row(p["ln1_g"]),
        pad_row(p["ln1_b"]),
        pad_row(p["out_b"]),
        pad_row(p["ln2_g"]),
        pad_row(p["ln2_b"]),
        pad_row(p["fc2_b"]),
        pad_row(p["fc1_b"]),
        pad_row(in_b),
    ])                                                           # (8, 4E) f32

    return (in_w.astype(bf),
            p["out_w"].astype(bf),
            p["fc1_w"].astype(bf),
            p["fc2_w"].astype(bf),
            vec_pack)


def clip_layer(x, params, n_head):
    B, S, E = x.shape
    kern = functools.partial(clip_layer_kernel, n_head=n_head)
    weights = prepare_params(params, n_head)
    weight_bytes = sum(int(w.size) * w.dtype.itemsize for w in weights)

    # Physical VMEM differs per generation (v5e/v6e: 128 MiB, v7x: 64 MiB).
    # Leave headroom for Mosaic internal scratch instead of capping at 64 MiB.
    try:
        vmem_cap = int(pltpu.get_tpu_info().vmem_capacity_bytes)
    except Exception:
        vmem_cap = 64 << 20
    vmem_cap = max(32 << 20, vmem_cap - (12 << 20))

    # Advisory cost hint for XLA scheduling around this fused custom call.
    flops = 24 * B * S * E * E + 4 * B * S * S * E
    transcendentals = B * n_head * S * S + 4 * B * S * E + 2 * B * S
    bytes_accessed = weight_bytes + 2 * B * S * E * x.dtype.itemsize
    cost = pl.CostEstimate(flops=int(flops),
                           transcendentals=int(transcendentals),
                           bytes_accessed=int(bytes_accessed))

    def build_and_run(single_buffer_weights):
        weight_kwargs = {}
        if single_buffer_weights:
            # Grid-invariant weights (index_map always (0,0)): one VMEM copy is
            # enough; default double-buffering would just burn VMEM (matters
            # most on v7x's 64 MiB).
            weight_kwargs = dict(pipeline_mode=pl.Buffered(1))

        in_specs = [pl.BlockSpec((1, S, E), lambda b: (b, 0, 0))]
        for w in weights:
            in_specs.append(
                pl.BlockSpec(w.shape, lambda b: (0, 0), **weight_kwargs))

        buf_factor = 1 if single_buffer_weights else 2
        act_bytes = 24 * S * E * 4 + n_head * S * S * 4    # f32 intermediates
        io_bytes = 2 * 2 * S * E * x.dtype.itemsize        # double-buffered x/out
        vmem_limit = buf_factor * weight_bytes + act_bytes + io_bytes + (4 << 20)
        vmem_limit = max(16 << 20, min(int(vmem_limit), vmem_cap))

        return pl.pallas_call(
            kern,
            out_shape=jax.ShapeDtypeStruct((B, S, E), x.dtype),
            grid=(B,),
            in_specs=in_specs,
            out_specs=pl.BlockSpec((1, S, E), lambda b: (b, 0, 0)),
            compiler_params=pltpu.CompilerParams(
                dimension_semantics=("parallel",),
                vmem_limit_bytes=vmem_limit),
            cost_estimate=cost,
        )(x, *weights)

    try:
        return build_and_run(single_buffer_weights=True)
    except Exception:
        # pl.Buffered(1) not supported on this JAX build: fall back to default
        # (double-buffered) weight pipelining.
        return build_and_run(single_buffer_weights=False)


def make_params(key, n_embed):
    ks = jax.random.split(key, 8)
    s = 0.02
    return {
        "ln1_g": jnp.ones((1, n_embed), jnp.float32),
        "ln1_b": jnp.zeros((1, n_embed), jnp.float32),
        "ln2_g": jnp.ones((1, n_embed), jnp.float32),
        "ln2_b": jnp.zeros((1, n_embed), jnp.float32),
        # SelfAttention: in_proj (E -> 3E), out_proj (E -> E), stored (in, out)
        "in_w": s * jax.random.normal(ks[0], (n_embed, 3 * n_embed), jnp.float32),
        "in_b": s * jax.random.normal(ks[1], (1, 3 * n_embed), jnp.float32),
        "out_w": s * jax.random.normal(ks[2], (n_embed, n_embed), jnp.float32),
        "out_b": s * jax.random.normal(ks[3], (1, n_embed), jnp.float32),
        # MLP: linear_1 (E -> 4E), linear_2 (4E -> E)
        "fc1_w": s * jax.random.normal(ks[4], (n_embed, 4 * n_embed), jnp.float32),
        "fc1_b": s * jax.random.normal(ks[5], (1, 4 * n_embed), jnp.float32),
        "fc2_w": s * jax.random.normal(ks[6], (4 * n_embed, n_embed), jnp.float32),
        "fc2_b": s * jax.random.normal(ks[7], (1, n_embed), jnp.float32),
    }


def ref_clip_layer(x, p, n_head):
    """Pure-JAX f32 reference mirroring the PyTorch forward."""
    B, S, E = x.shape
    dh = E // n_head

    def ln(h, g, b):
        mu = h.mean(-1, keepdims=True)
        var = ((h - mu) ** 2).mean(-1, keepdims=True)
        return (h - mu) / jnp.sqrt(var + 1e-5) * g + b

    residual = x
    h = ln(x, p["ln1_g"], p["ln1_b"])
    qkv = h @ p["in_w"] + p["in_b"]
    q, k, v = jnp.split(qkv, 3, axis=-1)
    q = q.reshape(B, S, n_head, dh).transpose(0, 2, 1, 3)
    k = k.reshape(B, S, n_head, dh).transpose(0, 2, 1, 3)
    v = v.reshape(B, S, n_head, dh).transpose(0, 2, 1, 3)
    w = jnp.einsum("bhqd,bhkd->bhqk", q, k)
    mask = jnp.triu(jnp.ones((S, S), bool), 1)
    w = jnp.where(mask, -jnp.inf, w)
    w = w / jnp.sqrt(jnp.float32(dh))
    w = jax.nn.softmax(w, axis=-1)
    o = jnp.einsum("bhqk,bhkd->bhqd", w, v)
    o = o.transpose(0, 2, 1, 3).reshape(B, S, E)
    x1 = o @ p["out_w"] + p["out_b"] + residual

    residual2 = x1
    h2 = ln(x1, p["ln2_g"], p["ln2_b"])
    h2 = h2 @ p["fc1_w"] + p["fc1_b"]
    h2 = h2 * jax.nn.sigmoid(h2 * 1.702)
    h2 = h2 @ p["fc2_w"] + p["fc2_b"]
    return h2 + residual2


if __name__ == "__main__":
    n_head, n_embed = 4, 32
    B, S = 2, 8

    key = jax.random.PRNGKey(0)
    kx, kp = jax.random.split(key)
    x = jax.random.normal(kx, (B, S, n_embed), jnp.float32)
    params = make_params(kp, n_embed)

    out = clip_layer(x, params, n_head)
    out = jax.block_until_ready(out)

    ref = ref_clip_layer(x, params, n_head)
    assert out.shape == (B, S, n_embed)
    # bf16 MXU operands + approx reciprocal vs. pure-f32 reference.
    assert jnp.allclose(out, ref, atol=1e-2, rtol=1e-2), "mismatch vs reference"

    print("KERNEL_OK")
</pallas_src>

<mosaic_0001>
module attributes {stable_mosaic.version = 11 : i64} {
  func.func @clip_layer_kernel(%arg0: i32, %arg1: memref<1x8x32xf32, #tpu.memory_space<vmem>>, %arg2: memref<32x96xbf16, #tpu.memory_space<vmem>>, %arg3: memref<32x32xbf16, #tpu.memory_space<vmem>>, %arg4: memref<32x128xbf16, #tpu.memory_space<vmem>>, %arg5: memref<128x32xbf16, #tpu.memory_space<vmem>>, %arg6: memref<8x128xf32, #tpu.memory_space<vmem>>, %arg7: memref<1x8x32xf32, #tpu.memory_space<vmem>>) attributes {dimension_semantics = [#tpu.dimension_semantics<parallel>], iteration_bounds = array<i64: 2>, scalar_prefetch = 0 : i64, scratch_operands = 0 : i64, tpu.core_type = #tpu.core_type<tc>, window_params = [{transform_indices = @transform_0, window_bounds = array<i64: 1, 8, 32>}, {pipeline_mode = #tpu.pipeline_mode<synchronous>, transform_indices = @transform_1, window_bounds = array<i64: 32, 96>}, {pipeline_mode = #tpu.pipeline_mode<synchronous>, transform_indices = @transform_2, window_bounds = array<i64: 32, 32>}, {pipeline_mode = #tpu.pipeline_mode<synchronous>, transform_indices = @transform_3, window_bounds = array<i64: 32, 128>}, {pipeline_mode = #tpu.pipeline_mode<synchronous>, transform_indices = @transform_4, window_bounds = array<i64: 128, 32>}, {pipeline_mode = #tpu.pipeline_mode<synchronous>, transform_indices = @transform_5, window_bounds = array<i64: 8, 128>}, {transform_indices = @transform_6, window_bounds = array<i64: 1, 8, 32>}]} {
    %c0 = arith.constant 0 : index
    %c0_0 = arith.constant 0 : index
    %c0_1 = arith.constant 0 : index
    %0 = vector.load %arg1[%c0, %c0_0, %c0_1] : memref<1x8x32xf32, #tpu.memory_space<vmem>>, vector<1x8x32xf32>
    %1 = vector.shape_cast %0 : vector<1x8x32xf32> to vector<8x32xf32>
    %c0_2 = arith.constant 0 : index
    %c0_3 = arith.constant 0 : index
    %2 = vector.load %arg6[%c0_2, %c0_3] : memref<8x128xf32, #tpu.memory_space<vmem>>, vector<1x32xf32>
    %c1 = arith.constant 1 : index
    %c0_4 = arith.constant 0 : index
    %3 = vector.load %arg6[%c1, %c0_4] : memref<8x128xf32, #tpu.memory_space<vmem>>, vector<1x32xf32>
    %c2 = arith.constant 2 : index
    %c0_5 = arith.constant 0 : index
    %4 = vector.load %arg6[%c2, %c0_5] : memref<8x128xf32, #tpu.memory_space<vmem>>, vector<1x32xf32>
    %c3 = arith.constant 3 : index
    %c0_6 = arith.constant 0 : index
    %5 = vector.load %arg6[%c3, %c0_6] : memref<8x128xf32, #tpu.memory_space<vmem>>, vector<1x32xf32>
    %c4 = arith.constant 4 : index
    %c0_7 = arith.constant 0 : index
    %6 = vector.load %arg6[%c4, %c0_7] : memref<8x128xf32, #tpu.memory_space<vmem>>, vector<1x32xf32>
    %c5 = arith.constant 5 : index
    %c0_8 = arith.constant 0 : index
    %7 = vector.load %arg6[%c5, %c0_8] : memref<8x128xf32, #tpu.memory_space<vmem>>, vector<1x32xf32>
    %c6 = arith.constant 6 : index
    %c0_9 = arith.constant 0 : index
    %8 = vector.load %arg6[%c6, %c0_9] : memref<8x128xf32, #tpu.memory_space<vmem>>, vector<1x128xf32>
    %c7 = arith.constant 7 : index
    %c0_10 = arith.constant 0 : index
    %9 = vector.load %arg6[%c7, %c0_10] : memref<8x128xf32, #tpu.memory_space<vmem>>, vector<1x96xf32>
    %cst = arith.constant dense<0.000000e+00> : vector<8xf32>
    %10 = vector.multi_reduction <add>, %1, %cst [1] : vector<8x32xf32> to vector<8xf32>
    %11 = vector.shape_cast %10 : vector<8xf32> to vector<8x1xf32>
    %cst_11 = arith.constant 3.200000e+01 : f32
    %12 = vector.broadcast %cst_11 : f32 to vector<8x1xf32>
    %13 = arith.divf %11, %12 : vector<8x1xf32>
    %14 = vector.broadcast %13 : vector<8x1xf32> to vector<8x32xf32>
    %15 = arith.subf %1, %14 : vector<8x32xf32>
    %16 = arith.mulf %15, %15 : vector<8x32xf32>
    %cst_12 = arith.constant dense<0.000000e+00> : vector<8xf32>
    %17 = vector.multi_reduction <add>, %16, %cst_12 [1] : vector<8x32xf32> to vector<8xf32>
    %18 = vector.shape_cast %17 : vector<8xf32> to vector<8x1xf32>
    %cst_13 = arith.constant 3.200000e+01 : f32
    %19 = vector.broadcast %cst_13 : f32 to vector<8x1xf32>
    %20 = arith.divf %18, %19 : vector<8x1xf32>
    %21 = vector.broadcast %13 : vector<8x1xf32> to vector<8x32xf32>
    %22 = arith.subf %1, %21 : vector<8x32xf32>
    %cst_14 = arith.constant 9.99999974E-6 : f32
    %23 = vector.broadcast %cst_14 : f32 to vector<8x1xf32>
    %24 = arith.addf %20, %23 : vector<8x1xf32>
    %25 = math.rsqrt %24 : vector<8x1xf32>
    %26 = vector.broadcast %25 : vector<8x1xf32> to vector<8x32xf32>
    %27 = arith.mulf %22, %26 : vector<8x32xf32>
    %28 = vector.broadcast %2 : vector<1x32xf32> to vector<8x32xf32>
    %29 = arith.mulf %27, %28 : vector<8x32xf32>
    %30 = vector.broadcast %3 : vector<1x32xf32> to vector<8x32xf32>
    %31 = arith.addf %29, %30 : vector<8x32xf32>
    %32 = arith.truncf %31 : vector<8x32xf32> to vector<8x32xbf16>
    %c0_15 = arith.constant 0 : index
    %c0_16 = arith.constant 0 : index
    %33 = vector.load %arg2[%c0_15, %c0_16] : memref<32x96xbf16, #tpu.memory_space<vmem>>, vector<32x96xbf16>
    %cst_17 = arith.constant dense<0.000000e+00> : vector<8x96xf32>
    %34 = tpu.matmul %32, %33, %cst_17 {dimension_numbers = #tpu.dot_dimension_numbers<[1], [0], [0], [1], [0, 0, 1, 1], [], []>} : vector<8x32xbf16>, vector<32x96xbf16>, vector<8x96xf32> -> vector<8x96xf32>
    %35 = vector.broadcast %9 : vector<1x96xf32> to vector<8x96xf32>
    %36 = arith.addf %34, %35 : vector<8x96xf32>
    %37 = arith.truncf %36 : vector<8x96xf32> to vector<8x96xbf16>
    %38 = tpu.iota {dimensions = array<i32: 0>} : vector<8x8xi32>
    %39 = tpu.iota {dimensions = array<i32: 1>} : vector<8x8xi32>
    %40 = arith.cmpi sle, %39, %38 : vector<8x8xi32>
    %41 = vector.extract_strided_slice %37 {offsets = [0, 0], sizes = [8, 8], strides = [1, 1]} : vector<8x96xbf16> to vector<8x8xbf16>
    %42 = vector.extract_strided_slice %37 {offsets = [0, 32], sizes = [8, 8], strides = [1, 1]} : vector<8x96xbf16> to vector<8x8xbf16>
    %43 = vector.extract_strided_slice %37 {offsets = [0, 64], sizes = [8, 8], strides = [1, 1]} : vector<8x96xbf16> to vector<8x8xbf16>
    %cst_18 = arith.constant dense<0.000000e+00> : vector<8x8xf32>
    %44 = tpu.matmul %41, %42, %cst_18 {dimension_numbers = #tpu.dot_dimension_numbers<[1], [1], [0], [0], [0, 0, 1, 0], [], []>} : vector<8x8xbf16>, vector<8x8xbf16>, vector<8x8xf32> -> vector<8x8xf32>
    %cst_19 = arith.constant -1.000000e+30 : f32
    %45 = vector.broadcast %cst_19 : f32 to vector<8x8xf32>
    %46 = arith.select %40, %44, %45 : vector<8x8xi1>, vector<8x8xf32>
    %cst_20 = arith.constant dense<0xFF800000> : vector<8xf32>
    %47 = vector.multi_reduction <maximumf>, %46, %cst_20 [1] : vector<8x8xf32> to vector<8xf32>
    %48 = vector.shape_cast %47 : vector<8xf32> to vector<8x1xf32>
    %49 = vector.broadcast %48 : vector<8x1xf32> to vector<8x8xf32>
    %50 = arith.subf %46, %49 : vector<8x8xf32>
    %51 = math.exp %50 : vector<8x8xf32>
    %cst_21 = arith.constant dense<0.000000e+00> : vector<8xf32>
    %52 = vector.multi_reduction <add>, %51, %cst_21 [1] : vector<8x8xf32> to vector<8xf32>
    %53 = vector.shape_cast %52 : vector<8xf32> to vector<8x1xf32>
    %54 = arith.truncf %51 : vector<8x8xf32> to vector<8x8xbf16>
    %cst_22 = arith.constant dense<0.000000e+00> : vector<8x8xf32>
    %55 = tpu.matmul %54, %43, %cst_22 {dimension_numbers = #tpu.dot_dimension_numbers<[1], [0], [0], [1], [0, 0, 1, 1], [], []>} : vector<8x8xbf16>, vector<8x8xbf16>, vector<8x8xf32> -> vector<8x8xf32>
    %56 = tpu.reciprocal %53 {approx = true} : vector<8x1xf32> -> vector<8x1xf32>
    %57 = vector.broadcast %56 : vector<8x1xf32> to vector<8x8xf32>
    %58 = arith.mulf %55, %57 : vector<8x8xf32>
    %59 = arith.truncf %58 : vector<8x8xf32> to vector<8x8xbf16>
    %60 = vector.extract_strided_slice %37 {offsets = [0, 8], sizes = [8, 8], strides = [1, 1]} : vector<8x96xbf16> to vector<8x8xbf16>
    %61 = vector.extract_strided_slice %37 {offsets = [0, 40], sizes = [8, 8], strides = [1, 1]} : vector<8x96xbf16> to vector<8x8xbf16>
    %62 = vector.extract_strided_slice %37 {offsets = [0, 72], sizes = [8, 8], strides = [1, 1]} : vector<8x96xbf16> to vector<8x8xbf16>
    %cst_23 = arith.constant dense<0.000000e+00> : vector<8x8xf32>
    %63 = tpu.matmul %60, %61, %cst_23 {dimension_numbers = #tpu.dot_dimension_numbers<[1], [1], [0], [0], [0, 0, 1, 0], [], []>} : vector<8x8xbf16>, vector<8x8xbf16>, vector<8x8xf32> -> vector<8x8xf32>
    %cst_24 = arith.constant -1.000000e+30 : f32
    %64 = vector.broadcast %cst_24 : f32 to vector<8x8xf32>
    %65 = arith.select %40, %63, %64 : vector<8x8xi1>, vector<8x8xf32>
    %cst_25 = arith.constant dense<0xFF800000> : vector<8xf32>
    %66 = vector.multi_reduction <maximumf>, %65, %cst_25 [1] : vector<8x8xf32> to vector<8xf32>
    %67 = vector.shape_cast %66 : vector<8xf32> to vector<8x1xf32>
    %68 = vector.broadcast %67 : vector<8x1xf32> to vector<8x8xf32>
    %69 = arith.subf %65, %68 : vector<8x8xf32>
    %70 = math.exp %69 : vector<8x8xf32>
    %cst_26 = arith.constant dense<0.000000e+00> : vector<8xf32>
    %71 = vector.multi_reduction <add>, %70, %cst_26 [1] : vector<8x8xf32> to vector<8xf32>
    %72 = vector.shape_cast %71 : vector<8xf32> to vector<8x1xf32>
    %73 = arith.truncf %70 : vector<8x8xf32> to vector<8x8xbf16>
    %cst_27 = arith.constant dense<0.000000e+00> : vector<8x8xf32>
    %74 = tpu.matmul %73, %62, %cst_27 {dimension_numbers = #tpu.dot_dimension_numbers<[1], [0], [0], [1], [0, 0, 1, 1], [], []>} : vector<8x8xbf16>, vector<8x8xbf16>, vector<8x8xf32> -> vector<8x8xf32>
    %75 = tpu.reciprocal %72 {approx = true} : vector<8x1xf32> -> vector<8x1xf32>
    %76 = vector.broadcast %75 : vector<8x1xf32> to vector<8x8xf32>
    %77 = arith.mulf %74, %76 : vector<8x8xf32>
    %78 = arith.truncf %77 : vector<8x8xf32> to vector<8x8xbf16>
    %79 = vector.extract_strided_slice %37 {offsets = [0, 16], sizes = [8, 8], strides = [1, 1]} : vector<8x96xbf16> to vector<8x8xbf16>
    %80 = vector.extract_strided_slice %37 {offsets = [0, 48], sizes = [8, 8], strides = [1, 1]} : vector<8x96xbf16> to vector<8x8xbf16>
    %81 = vector.extract_strided_slice %37 {offsets = [0, 80], sizes = [8, 8], strides = [1, 1]} : vector<8x96xbf16> to vector<8x8xbf16>
    %cst_28 = arith.constant dense<0.000000e+00> : vector<8x8xf32>
    %82 = tpu.matmul %79, %80, %cst_28 {dimension_numbers = #tpu.dot_dimension_numbers<[1], [1], [0], [0], [0, 0, 1, 0], [], []>} : vector<8x8xbf16>, vector<8x8xbf16>, vector<8x8xf32> -> vector<8x8xf32>
    %cst_29 = arith.constant -1.000000e+30 : f32
    %83 = vector.broadcast %cst_29 : f32 to vector<8x8xf32>
    %84 = arith.select %40, %82, %83 : vector<8x8xi1>, vector<8x8xf32>
    %cst_30 = arith.constant dense<0xFF800000> : vector<8xf32>
    %85 = vector.multi_reduction <maximumf>, %84, %cst_30 [1] : vector<8x8xf32> to vector<8xf32>
    %86 = vector.shape_cast %85 : vector<8xf32> to vector<8x1xf32>
    %87 = vector.broadcast %86 : vector<8x1xf32> to vector<8x8xf32>
    %88 = arith.subf %84, %87 : vector<8x8xf32>
    %89 = math.exp %88 : vector<8x8xf32>
    %cst_31 = arith.constant dense<0.000000e+00> : vector<8xf32>
    %90 = vector.multi_reduction <add>, %89, %cst_31 [1] : vector<8x8xf32> to vector<8xf32>
    %91 = vector.shape_cast %90 : vector<8xf32> to vector<8x1xf32>
    %92 = arith.truncf %89 : vector<8x8xf32> to vector<8x8xbf16>
    %cst_32 = arith.constant dense<0.000000e+00> : vector<8x8xf32>
    %93 = tpu.matmul %92, %81, %cst_32 {dimension_numbers = #tpu.dot_dimension_numbers<[1], [0], [0], [1], [0, 0, 1, 1], [], []>} : vector<8x8xbf16>, vector<8x8xbf16>, vector<8x8xf32> -> vector<8x8xf32>
    %94 = tpu.reciprocal %91 {approx = true} : vector<8x1xf32> -> vector<8x1xf32>
    %95 = vector.broadcast %94 : vector<8x1xf32> to vector<8x8xf32>
    %96 = arith.mulf %93, %95 : vector<8x8xf32>
    %97 = arith.truncf %96 : vector<8x8xf32> to vector<8x8xbf16>
    %98 = vector.extract_strided_slice %37 {offsets = [0, 24], sizes = [8, 8], strides = [1, 1]} : vector<8x96xbf16> to vector<8x8xbf16>
    %99 = vector.extract_strided_slice %37 {offsets = [0, 56], sizes = [8, 8], strides = [1, 1]} : vector<8x96xbf16> to vector<8x8xbf16>
    %100 = vector.extract_strided_slice %37 {offsets = [0, 88], sizes = [8, 8], strides = [1, 1]} : vector<8x96xbf16> to vector<8x8xbf16>
    %cst_33 = arith.constant dense<0.000000e+00> : vector<8x8xf32>
    %101 = tpu.matmul %98, %99, %cst_33 {dimension_numbers = #tpu.dot_dimension_numbers<[1], [1], [0], [0], [0, 0, 1, 0], [], []>} : vector<8x8xbf16>, vector<8x8xbf16>, vector<8x8xf32> -> vector<8x8xf32>
    %cst_34 = arith.constant -1.000000e+30 : f32
    %102 = vector.broadcast %cst_34 : f32 to vector<8x8xf32>
    %103 = arith.select %40, %101, %102 : vector<8x8xi1>, vector<8x8xf32>
    %cst_35 = arith.constant dense<0xFF800000> : vector<8xf32>
    %104 = vector.multi_reduction <maximumf>, %103, %cst_35 [1] : vector<8x8xf32> to vector<8xf32>
    %105 = vector.shape_cast %104 : vector<8xf32> to vector<8x1xf32>
    %106 = vector.broadcast %105 : vector<8x1xf32> to vector<8x8xf32>
    %107 = arith.subf %103, %106 : vector<8x8xf32>
    %108 = math.exp %107 : vector<8x8xf32>
    %cst_36 = arith.constant dense<0.000000e+00> : vector<8xf32>
    %109 = vector.multi_reduction <add>, %108, %cst_36 [1] : vector<8x8xf32> to vector<8xf32>
    %110 = vector.shape_cast %109 : vector<8xf32> to vector<8x1xf32>
    %111 = arith.truncf %108 : vector<8x8xf32> to vector<8x8xbf16>
    %cst_37 = arith.constant dense<0.000000e+00> : vector<8x8xf32>
    %112 = tpu.matmul %111, %100, %cst_37 {dimension_numbers = #tpu.dot_dimension_numbers<[1], [0], [0], [1], [0, 0, 1, 1], [], []>} : vector<8x8xbf16>, vector<8x8xbf16>, vector<8x8xf32> -> vector<8x8xf32>
    %113 = tpu.reciprocal %110 {approx = true} : vector<8x1xf32> -> vector<8x1xf32>
    %114 = vector.broadcast %113 : vector<8x1xf32> to vector<8x8xf32>
    %115 = arith.mulf %112, %114 : vector<8x8xf32>
    %116 = arith.truncf %115 : vector<8x8xf32> to vector<8x8xbf16>
    %117 = tpu.concatenate %59, %78, %97, %116 in 1 : vector<8x8xbf16>, vector<8x8xbf16>, vector<8x8xbf16>, vector<8x8xbf16> -> vector<8x32xbf16>
    %c0_38 = arith.constant 0 : index
    %c0_39 = arith.constant 0 : index
    %118 = vector.load %arg3[%c0_38, %c0_39] : memref<32x32xbf16, #tpu.memory_space<vmem>>, vector<32x32xbf16>
    %cst_40 = arith.constant dense<0.000000e+00> : vector<8x32xf32>
    %119 = tpu.matmul %117, %118, %cst_40 {dimension_numbers = #tpu.dot_dimension_numbers<[1], [0], [0], [1], [0, 0, 1, 1], [], []>} : vector<8x32xbf16>, vector<32x32xbf16>, vector<8x32xf32> -> vector<8x32xf32>
    %120 = vector.broadcast %4 : vector<1x32xf32> to vector<8x32xf32>
    %121 = arith.addf %119, %120 : vector<8x32xf32>
    %122 = arith.addf %121, %1 : vector<8x32xf32>
    %cst_41 = arith.constant dense<0.000000e+00> : vector<8xf32>
    %123 = vector.multi_reduction <add>, %122, %cst_41 [1] : vector<8x32xf32> to vector<8xf32>
    %124 = vector.shape_cast %123 : vector<8xf32> to vector<8x1xf32>
    %cst_42 = arith.constant 3.200000e+01 : f32
    %125 = vector.broadcast %cst_42 : f32 to vector<8x1xf32>
    %126 = arith.divf %124, %125 : vector<8x1xf32>
    %127 = vector.broadcast %126 : vector<8x1xf32> to vector<8x32xf32>
    %128 = arith.subf %122, %127 : vector<8x32xf32>
    %129 = arith.mulf %128, %128 : vector<8x32xf32>
    %cst_43 = arith.constant dense<0.000000e+00> : vector<8xf32>
    %130 = vector.multi_reduction <add>, %129, %cst_43 [1] : vector<8x32xf32> to vector<8xf32>
    %131 = vector.shape_cast %130 : vector<8xf32> to vector<8x1xf32>
    %cst_44 = arith.constant 3.200000e+01 : f32
    %132 = vector.broadcast %cst_44 : f32 to vector<8x1xf32>
    %133 = arith.divf %131, %132 : vector<8x1xf32>
    %134 = vector.broadcast %126 : vector<8x1xf32> to vector<8x32xf32>
    %135 = arith.subf %122, %134 : vector<8x32xf32>
    %cst_45 = arith.constant 9.99999974E-6 : f32
    %136 = vector.broadcast %cst_45 : f32 to vector<8x1xf32>
    %137 = arith.addf %133, %136 : vector<8x1xf32>
    %138 = math.rsqrt %137 : vector<8x1xf32>
    %139 = vector.broadcast %138 : vector<8x1xf32> to vector<8x32xf32>
    %140 = arith.mulf %135, %139 : vector<8x32xf32>
    %141 = vector.broadcast %5 : vector<1x32xf32> to vector<8x32xf32>
    %142 = arith.mulf %140, %141 : vector<8x32xf32>
    %143 = vector.broadcast %6 : vector<1x32xf32> to vector<8x32xf32>
    %144 = arith.addf %142, %143 : vector<8x32xf32>
    %145 = arith.truncf %144 : vector<8x32xf32> to vector<8x32xbf16>
    %c0_46 = arith.constant 0 : index
    %c0_47 = arith.constant 0 : index
    %146 = vector.load %arg4[%c0_46, %c0_47] : memref<32x128xbf16, #tpu.memory_space<vmem>>, vector<32x128xbf16>
    %cst_48 = arith.constant dense<0.000000e+00> : vector<8x128xf32>
    %147 = tpu.matmul %145, %146, %cst_48 {dimension_numbers = #tpu.dot_dimension_numbers<[1], [0], [0], [1], [0, 0, 1, 1], [], []>} : vector<8x32xbf16>, vector<32x128xbf16>, vector<8x128xf32> -> vector<8x128xf32>
    %148 = vector.broadcast %8 : vector<1x128xf32> to vector<8x128xf32>
    %149 = arith.addf %147, %148 : vector<8x128xf32>
    %cst_49 = arith.constant 1.702000e+00 : f32
    %150 = vector.broadcast %cst_49 : f32 to vector<8x128xf32>
    %151 = arith.mulf %149, %150 : vector<8x128xf32>
    %152 = arith.negf %151 : vector<8x128xf32>
    %153 = math.exp %152 : vector<8x128xf32>
    %cst_50 = arith.constant 1.000000e+00 : f32
    %154 = vector.broadcast %cst_50 : f32 to vector<8x128xf32>
    %155 = arith.addf %154, %153 : vector<8x128xf32>
    %156 = arith.divf %154, %155 : vector<8x128xf32>
    %157 = arith.mulf %149, %156 : vector<8x128xf32>
    %158 = arith.truncf %157 : vector<8x128xf32> to vector<8x128xbf16>
    %c0_51 = arith.constant 0 : index
    %c0_52 = arith.constant 0 : index
    %159 = vector.load %arg5[%c0_51, %c0_52] : memref<128x32xbf16, #tpu.memory_space<vmem>>, vector<128x32xbf16>
    %cst_53 = arith.constant dense<0.000000e+00> : vector<8x32xf32>
    %160 = tpu.matmul %158, %159, %cst_53 {dimension_numbers = #tpu.dot_dimension_numbers<[1], [0], [0], [1], [0, 0, 1, 1], [], []>} : vector<8x128xbf16>, vector<128x32xbf16>, vector<8x32xf32> -> vector<8x32xf32>
    %161 = vector.broadcast %7 : vector<1x32xf32> to vector<8x32xf32>
    %162 = arith.addf %160, %161 : vector<8x32xf32>
    %163 = arith.addf %162, %122 : vector<8x32xf32>
    %c0_54 = arith.constant 0 : index
    %c0_55 = arith.constant 0 : index
    %c0_56 = arith.constant 0 : index
    %164 = vector.load %arg7[%c0_54, %c0_55, %c0_56] : memref<1x8x32xf32, #tpu.memory_space<vmem>>, vector<1x8x32xf32>
    %165 = vector.shape_cast %164 : vector<1x8x32xf32> to vector<8x32xf32>
    %166 = vector.shape_cast %163 : vector<8x32xf32> to vector<1x8x32xf32>
    tpu.vector_store %arg7[%c0_54, %c0_55, %c0_56], %166 {strides = array<i32>} : memref<1x8x32xf32, #tpu.memory_space<vmem>>, vector<1x8x32xf32>,
    return
  }
  func.func @transform_0(%arg0: i32) -> (i32, i32, i32) {
    %c0_i32 = arith.constant 0 : i32
    %c0_i32_0 = arith.constant 0 : i32
    %c0_i32_1 = arith.constant 0 : i32
    return %arg0, %c0_i32, %c0_i32_0 : i32, i32, i32
  }
  func.func @transform_1(%arg0: i32) -> (i32, i32) {
    %c0_i32 = arith.constant 0 : i32
    %c0_i32_0 = arith.constant 0 : i32
    %c0_i32_1 = arith.constant 0 : i32
    return %c0_i32, %c0_i32_0 : i32, i32
  }
  func.func @transform_2(%arg0: i32) -> (i32, i32) {
    %c0_i32 = arith.constant 0 : i32
    %c0_i32_0 = arith.constant 0 : i32
    %c0_i32_1 = arith.constant 0 : i32
    return %c0_i32, %c0_i32_0 : i32, i32
  }
  func.func @transform_3(%arg0: i32) -> (i32, i32) {
    %c0_i32 = arith.constant 0 : i32
    %c0_i32_0 = arith.constant 0 : i32
    %c0_i32_1 = arith.constant 0 : i32
    return %c0_i32, %c0_i32_0 : i32, i32
  }
  func.func @transform_4(%arg0: i32) -> (i32, i32) {
    %c0_i32 = arith.constant 0 : i32
    %c0_i32_0 = arith.constant 0 : i32
    %c0_i32_1 = arith.constant 0 : i32
    return %c0_i32, %c0_i32_0 : i32, i32
  }
  func.func @transform_5(%arg0: i32) -> (i32, i32) {
    %c0_i32 = arith.constant 0 : i32
    %c0_i32_0 = arith.constant 0 : i32
    %c0_i32_1 = arith.constant 0 : i32
    return %c0_i32, %c0_i32_0 : i32, i32
  }
  func.func @transform_6(%arg0: i32) -> (i32, i32, i32) {
    %c0_i32 = arith.constant 0 : i32
    %c0_i32_0 = arith.constant 0 : i32
    %c0_i32_1 = arith.constant 0 : i32
    return %arg0, %c0_i32, %c0_i32_0 : i32, i32, i32
  }
}

module attributes {stable_mosaic.version = 11 : i64} {
  func.func @clip_layer_kernel(%arg0: i32, %arg1: memref<1x8x32xf32, #tpu.memory_space<vmem>>, %arg2: memref<32x96xbf16, #tpu.memory_space<vmem>>, %arg3: memref<32x32xbf16, #tpu.memory_space<vmem>>, %arg4: memref<32x128xbf16, #tpu.memory_space<vmem>>, %arg5: memref<128x32xbf16, #tpu.memory_space<vmem>>, %arg6: memref<8x128xf32, #tpu.memory_space<vmem>>, %arg7: memref<1x8x32xf32, #tpu.memory_space<vmem>>) attributes {dimension_semantics = [#tpu.dimension_semantics<parallel>], iteration_bounds = array<i64: 2>, scalar_prefetch = 0 : i64, scratch_operands = 0 : i64, tpu.core_type = #tpu.core_type<tc>, window_params = [{transform_indices = @transform_0, window_bounds = array<i64: 1, 8, 32>}, {pipeline_mode = #tpu.pipeline_mode<synchronous>, transform_indices = @transform_1, window_bounds = array<i64: 32, 96>}, {pipeline_mode = #tpu.pipeline_mode<synchronous>, transform_indices = @transform_2, window_bounds = array<i64: 32, 32>}, {pipeline_mode = #tpu.pipeline_mode<synchronous>, transform_indices = @transform_3, window_bounds = array<i64: 32, 128>}, {pipeline_mode = #tpu.pipeline_mode<synchronous>, transform_indices = @transform_4, window_bounds = array<i64: 128, 32>}, {pipeline_mode = #tpu.pipeline_mode<synchronous>, transform_indices = @transform_5, window_bounds = array<i64: 8, 128>}, {transform_indices = @transform_6, window_bounds = array<i64: 1, 8, 32>}]} {
    %c0 = arith.constant 0 : index
    %c0_0 = arith.constant 0 : index
    %c0_1 = arith.constant 0 : index
    %0 = vector.load %arg1[%c0, %c0_0, %c0_1] : memref<1x8x32xf32, #tpu.memory_space<vmem>>, vector<1x8x32xf32>
    %1 = vector.shape_cast %0 : vector<1x8x32xf32> to vector<8x32xf32>
    %c0_2 = arith.constant 0 : index
    %c0_3 = arith.constant 0 : index
    %2 = vector.load %arg6[%c0_2, %c0_3] : memref<8x128xf32, #tpu.memory_space<vmem>>, vector<1x32xf32>
    %c1 = arith.constant 1 : index
    %c0_4 = arith.constant 0 : index
    %3 = vector.load %arg6[%c1, %c0_4] : memref<8x128xf32, #tpu.memory_space<vmem>>, vector<1x32xf32>
    %c2 = arith.constant 2 : index
    %c0_5 = arith.constant 0 : index
    %4 = vector.load %arg6[%c2, %c0_5] : memref<8x128xf32, #tpu.memory_space<vmem>>, vector<1x32xf32>
    %c3 = arith.constant 3 : index
    %c0_6 = arith.constant 0 : index
    %5 = vector.load %arg6[%c3, %c0_6] : memref<8x128xf32, #tpu.memory_space<vmem>>, vector<1x32xf32>
    %c4 = arith.constant 4 : index
    %c0_7 = arith.constant 0 : index
    %6 = vector.load %arg6[%c4, %c0_7] : memref<8x128xf32, #tpu.memory_space<vmem>>, vector<1x32xf32>
    %c5 = arith.constant 5 : index
    %c0_8 = arith.constant 0 : index
    %7 = vector.load %arg6[%c5, %c0_8] : memref<8x128xf32, #tpu.memory_space<vmem>>, vector<1x32xf32>
    %c6 = arith.constant 6 : index
    %c0_9 = arith.constant 0 : index
    %8 = vector.load %arg6[%c6, %c0_9] : memref<8x128xf32, #tpu.memory_space<vmem>>, vector<1x128xf32>
    %c7 = arith.constant 7 : index
    %c0_10 = arith.constant 0 : index
    %9 = vector.load %arg6[%c7, %c0_10] : memref<8x128xf32, #tpu.memory_space<vmem>>, vector<1x96xf32>
    %cst = arith.constant dense<0.000000e+00> : vector<8xf32>
    %10 = vector.multi_reduction <add>, %1, %cst [1] : vector<8x32xf32> to vector<8xf32>
    %11 = vector.shape_cast %10 : vector<8xf32> to vector<8x1xf32>
    %cst_11 = arith.constant 3.200000e+01 : f32
    %12 = vector.broadcast %cst_11 : f32 to vector<8x1xf32>
    %13 = arith.divf %11, %12 : vector<8x1xf32>
    %14 = vector.broadcast %13 : vector<8x1xf32> to vector<8x32xf32>
    %15 = arith.subf %1, %14 : vector<8x32xf32>
    %16 = arith.mulf %15, %15 : vector<8x32xf32>
    %cst_12 = arith.constant dense<0.000000e+00> : vector<8xf32>
    %17 = vector.multi_reduction <add>, %16, %cst_12 [1] : vector<8x32xf32> to vector<8xf32>
    %18 = vector.shape_cast %17 : vector<8xf32> to vector<8x1xf32>
    %cst_13 = arith.constant 3.200000e+01 : f32
    %19 = vector.broadcast %cst_13 : f32 to vector<8x1xf32>
    %20 = arith.divf %18, %19 : vector<8x1xf32>
    %21 = vector.broadcast %13 : vector<8x1xf32> to vector<8x32xf32>
    %22 = arith.subf %1, %21 : vector<8x32xf32>
    %cst_14 = arith.constant 9.99999974E-6 : f32
    %23 = vector.broadcast %cst_14 : f32 to vector<8x1xf32>
    %24 = arith.addf %20, %23 : vector<8x1xf32>
    %25 = math.rsqrt %24 : vector<8x1xf32>
    %26 = vector.broadcast %25 : vector<8x1xf32> to vector<8x32xf32>
    %27 = arith.mulf %22, %26 : vector<8x32xf32>
    %28 = vector.broadcast %2 : vector<1x32xf32> to vector<8x32xf32>
    %29 = arith.mulf %27, %28 : vector<8x32xf32>
    %30 = vector.broadcast %3 : vector<1x32xf32> to vector<8x32xf32>
    %31 = arith.addf %29, %30 : vector<8x32xf32>
    %32 = arith.truncf %31 : vector<8x32xf32> to vector<8x32xbf16>
    %c0_15 = arith.constant 0 : index
    %c0_16 = arith.constant 0 : index
    %33 = vector.load %arg2[%c0_15, %c0_16] : memref<32x96xbf16, #tpu.memory_space<vmem>>, vector<32x96xbf16>
    %cst_17 = arith.constant dense<0.000000e+00> : vector<8x96xf32>
    %34 = tpu.matmul %32, %33, %cst_17 {dimension_numbers = #tpu.dot_dimension_numbers<[1], [0], [0], [1], [0, 0, 1, 1], [], []>} : vector<8x32xbf16>, vector<32x96xbf16>, vector<8x96xf32> -> vector<8x96xf32>
    %35 = vector.broadcast %9 : vector<1x96xf32> to vector<8x96xf32>
    %36 = arith.addf %34, %35 : vector<8x96xf32>
    %37 = arith.truncf %36 : vector<8x96xf32> to vector<8x96xbf16>
    %38 = tpu.iota {dimensions = array<i32: 0>} : vector<8x8xi32>
    %39 = tpu.iota {dimensions = array<i32: 1>} : vector<8x8xi32>
    %40 = arith.cmpi sle, %39, %38 : vector<8x8xi32>
    %41 = vector.extract_strided_slice %37 {offsets = [0, 0], sizes = [8, 8], strides = [1, 1]} : vector<8x96xbf16> to vector<8x8xbf16>
    %42 = vector.extract_strided_slice %37 {offsets = [0, 32], sizes = [8, 8], strides = [1, 1]} : vector<8x96xbf16> to vector<8x8xbf16>
    %43 = vector.extract_strided_slice %37 {offsets = [0, 64], sizes = [8, 8], strides = [1, 1]} : vector<8x96xbf16> to vector<8x8xbf16>
    %cst_18 = arith.constant dense<0.000000e+00> : vector<8x8xf32>
    %44 = tpu.matmul %41, %42, %cst_18 {dimension_numbers = #tpu.dot_dimension_numbers<[1], [1], [0], [0], [0, 0, 1, 0], [], []>} : vector<8x8xbf16>, vector<8x8xbf16>, vector<8x8xf32> -> vector<8x8xf32>
    %cst_19 = arith.constant -1.000000e+30 : f32
    %45 = vector.broadcast %cst_19 : f32 to vector<8x8xf32>
    %46 = arith.select %40, %44, %45 : vector<8x8xi1>, vector<8x8xf32>
    %cst_20 = arith.constant dense<0xFF800000> : vector<8xf32>
    %47 = vector.multi_reduction <maximumf>, %46, %cst_20 [1] : vector<8x8xf32> to vector<8xf32>
    %48 = vector.shape_cast %47 : vector<8xf32> to vector<8x1xf32>
    %49 = vector.broadcast %48 : vector<8x1xf32> to vector<8x8xf32>
    %50 = arith.subf %46, %49 : vector<8x8xf32>
    %51 = math.exp %50 : vector<8x8xf32>
    %cst_21 = arith.constant dense<0.000000e+00> : vector<8xf32>
    %52 = vector.multi_reduction <add>, %51, %cst_21 [1] : vector<8x8xf32> to vector<8xf32>
    %53 = vector.shape_cast %52 : vector<8xf32> to vector<8x1xf32>
    %54 = arith.truncf %51 : vector<8x8xf32> to vector<8x8xbf16>
    %cst_22 = arith.constant dense<0.000000e+00> : vector<8x8xf32>
    %55 = tpu.matmul %54, %43, %cst_22 {dimension_numbers = #tpu.dot_dimension_numbers<[1], [0], [0], [1], [0, 0, 1, 1], [], []>} : vector<8x8xbf16>, vector<8x8xbf16>, vector<8x8xf32> -> vector<8x8xf32>
    %56 = tpu.reciprocal %53 {approx = true} : vector<8x1xf32> -> vector<8x1xf32>
    %57 = vector.broadcast %56 : vector<8x1xf32> to vector<8x8xf32>
    %58 = arith.mulf %55, %57 : vector<8x8xf32>
    %59 = arith.truncf %58 : vector<8x8xf32> to vector<8x8xbf16>
    %60 = vector.extract_strided_slice %37 {offsets = [0, 8], sizes = [8, 8], strides = [1, 1]} : vector<8x96xbf16> to vector<8x8xbf16>
    %61 = vector.extract_strided_slice %37 {offsets = [0, 40], sizes = [8, 8], strides = [1, 1]} : vector<8x96xbf16> to vector<8x8xbf16>
    %62 = vector.extract_strided_slice %37 {offsets = [0, 72], sizes = [8, 8], strides = [1, 1]} : vector<8x96xbf16> to vector<8x8xbf16>
    %cst_23 = arith.constant dense<0.000000e+00> : vector<8x8xf32>
    %63 = tpu.matmul %60, %61, %cst_23 {dimension_numbers = #tpu.dot_dimension_numbers<[1], [1], [0], [0], [0, 0, 1, 0], [], []>} : vector<8x8xbf16>, vector<8x8xbf16>, vector<8x8xf32> -> vector<8x8xf32>
    %cst_24 = arith.constant -1.000000e+30 : f32
    %64 = vector.broadcast %cst_24 : f32 to vector<8x8xf32>
    %65 = arith.select %40, %63, %64 : vector<8x8xi1>, vector<8x8xf32>
    %cst_25 = arith.constant dense<0xFF800000> : vector<8xf32>
    %66 = vector.multi_reduction <maximumf>, %65, %cst_25 [1] : vector<8x8xf32> to vector<8xf32>
    %67 = vector.shape_cast %66 : vector<8xf32> to vector<8x1xf32>
    %68 = vector.broadcast %67 : vector<8x1xf32> to vector<8x8xf32>
    %69 = arith.subf %65, %68 : vector<8x8xf32>
    %70 = math.exp %69 : vector<8x8xf32>
    %cst_26 = arith.constant dense<0.000000e+00> : vector<8xf32>
    %71 = vector.multi_reduction <add>, %70, %cst_26 [1] : vector<8x8xf32> to vector<8xf32>
    %72 = vector.shape_cast %71 : vector<8xf32> to vector<8x1xf32>
    %73 = arith.truncf %70 : vector<8x8xf32> to vector<8x8xbf16>
    %cst_27 = arith.constant dense<0.000000e+00> : vector<8x8xf32>
    %74 = tpu.matmul %73, %62, %cst_27 {dimension_numbers = #tpu.dot_dimension_numbers<[1], [0], [0], [1], [0, 0, 1, 1], [], []>} : vector<8x8xbf16>, vector<8x8xbf16>, vector<8x8xf32> -> vector<8x8xf32>
    %75 = tpu.reciprocal %72 {approx = true} : vector<8x1xf32> -> vector<8x1xf32>
    %76 = vector.broadcast %75 : vector<8x1xf32> to vector<8x8xf32>
    %77 = arith.mulf %74, %76 : vector<8x8xf32>
    %78 = arith.truncf %77 : vector<8x8xf32> to vector<8x8xbf16>
    %79 = vector.extract_strided_slice %37 {offsets = [0, 16], sizes = [8, 8], strides = [1, 1]} : vector<8x96xbf16> to vector<8x8xbf16>
    %80 = vector.extract_strided_slice %37 {offsets = [0, 48], sizes = [8, 8], strides = [1, 1]} : vector<8x96xbf16> to vector<8x8xbf16>
    %81 = vector.extract_strided_slice %37 {offsets = [0, 80], sizes = [8, 8], strides = [1, 1]} : vector<8x96xbf16> to vector<8x8xbf16>
    %cst_28 = arith.constant dense<0.000000e+00> : vector<8x8xf32>
    %82 = tpu.matmul %79, %80, %cst_28 {dimension_numbers = #tpu.dot_dimension_numbers<[1], [1], [0], [0], [0, 0, 1, 0], [], []>} : vector<8x8xbf16>, vector<8x8xbf16>, vector<8x8xf32> -> vector<8x8xf32>
    %cst_29 = arith.constant -1.000000e+30 : f32
    %83 = vector.broadcast %cst_29 : f32 to vector<8x8xf32>
    %84 = arith.select %40, %82, %83 : vector<8x8xi1>, vector<8x8xf32>
    %cst_30 = arith.constant dense<0xFF800000> : vector<8xf32>
    %85 = vector.multi_reduction <maximumf>, %84, %cst_30 [1] : vector<8x8xf32> to vector<8xf32>
    %86 = vector.shape_cast %85 : vector<8xf32> to vector<8x1xf32>
    %87 = vector.broadcast %86 : vector<8x1xf32> to vector<8x8xf32>
    %88 = arith.subf %84, %87 : vector<8x8xf32>
    %89 = math.exp %88 : vector<8x8xf32>
    %cst_31 = arith.constant dense<0.000000e+00> : vector<8xf32>
    %90 = vector.multi_reduction <add>, %89, %cst_31 [1] : vector<8x8xf32> to vector<8xf32>
    %91 = vector.shape_cast %90 : vector<8xf32> to vector<8x1xf32>
    %92 = arith.truncf %89 : vector<8x8xf32> to vector<8x8xbf16>
    %cst_32 = arith.constant dense<0.000000e+00> : vector<8x8xf32>
    %93 = tpu.matmul %92, %81, %cst_32 {dimension_numbers = #tpu.dot_dimension_numbers<[1], [0], [0], [1], [0, 0, 1, 1], [], []>} : vector<8x8xbf16>, vector<8x8xbf16>, vector<8x8xf32> -> vector<8x8xf32>
    %94 = tpu.reciprocal %91 {approx = true} : vector<8x1xf32> -> vector<8x1xf32>
    %95 = vector.broadcast %94 : vector<8x1xf32> to vector<8x8xf32>
    %96 = arith.mulf %93, %95 : vector<8x8xf32>
    %97 = arith.truncf %96 : vector<8x8xf32> to vector<8x8xbf16>
    %98 = vector.extract_strided_slice %37 {offsets = [0, 24], sizes = [8, 8], strides = [1, 1]} : vector<8x96xbf16> to vector<8x8xbf16>
    %99 = vector.extract_strided_slice %37 {offsets = [0, 56], sizes = [8, 8], strides = [1, 1]} : vector<8x96xbf16> to vector<8x8xbf16>
    %100 = vector.extract_strided_slice %37 {offsets = [0, 88], sizes = [8, 8], strides = [1, 1]} : vector<8x96xbf16> to vector<8x8xbf16>
    %cst_33 = arith.constant dense<0.000000e+00> : vector<8x8xf32>
    %101 = tpu.matmul %98, %99, %cst_33 {dimension_numbers = #tpu.dot_dimension_numbers<[1], [1], [0], [0], [0, 0, 1, 0], [], []>} : vector<8x8xbf16>, vector<8x8xbf16>, vector<8x8xf32> -> vector<8x8xf32>
    %cst_34 = arith.constant -1.000000e+30 : f32
    %102 = vector.broadcast %cst_34 : f32 to vector<8x8xf32>
    %103 = arith.select %40, %101, %102 : vector<8x8xi1>, vector<8x8xf32>
    %cst_35 = arith.constant dense<0xFF800000> : vector<8xf32>
    %104 = vector.multi_reduction <maximumf>, %103, %cst_35 [1] : vector<8x8xf32> to vector<8xf32>
    %105 = vector.shape_cast %104 : vector<8xf32> to vector<8x1xf32>
    %106 = vector.broadcast %105 : vector<8x1xf32> to vector<8x8xf32>
    %107 = arith.subf %103, %106 : vector<8x8xf32>
    %108 = math.exp %107 : vector<8x8xf32>
    %cst_36 = arith.constant dense<0.000000e+00> : vector<8xf32>
    %109 = vector.multi_reduction <add>, %108, %cst_36 [1] : vector<8x8xf32> to vector<8xf32>
    %110 = vector.shape_cast %109 : vector<8xf32> to vector<8x1xf32>
    %111 = arith.truncf %108 : vector<8x8xf32> to vector<8x8xbf16>
    %cst_37 = arith.constant dense<0.000000e+00> : vector<8x8xf32>
    %112 = tpu.matmul %111, %100, %cst_37 {dimension_numbers = #tpu.dot_dimension_numbers<[1], [0], [0], [1], [0, 0, 1, 1], [], []>} : vector<8x8xbf16>, vector<8x8xbf16>, vector<8x8xf32> -> vector<8x8xf32>
    %113 = tpu.reciprocal %110 {approx = true} : vector<8x1xf32> -> vector<8x1xf32>
    %114 = vector.broadcast %113 : vector<8x1xf32> to vector<8x8xf32>
    %115 = arith.mulf %112, %114 : vector<8x8xf32>
    %116 = arith.truncf %115 : vector<8x8xf32> to vector<8x8xbf16>
    %117 = tpu.concatenate %59, %78, %97, %116 in 1 : vector<8x8xbf16>, vector<8x8xbf16>, vector<8x8xbf16>, vector<8x8xbf16> -> vector<8x32xbf16>
    %c0_38 = arith.constant 0 : index
    %c0_39 = arith.constant 0 : index
    %118 = vector.load %arg3[%c0_38, %c0_39] : memref<32x32xbf16, #tpu.memory_space<vmem>>, vector<32x32xbf16>
    %cst_40 = arith.constant dense<0.000000e+00> : vector<8x32xf32>
    %119 = tpu.matmul %117, %118, %cst_40 {dimension_numbers = #tpu.dot_dimension_numbers<[1], [0], [0], [1], [0, 0, 1, 1], [], []>} : vector<8x32xbf16>, vector<32x32xbf16>, vector<8x32xf32> -> vector<8x32xf32>
    %120 = vector.broadcast %4 : vector<1x32xf32> to vector<8x32xf32>
    %121 = arith.addf %119, %120 : vector<8x32xf32>
    %122 = arith.addf %121, %1 : vector<8x32xf32>
    %cst_41 = arith.constant dense<0.000000e+00> : vector<8xf32>
    %123 = vector.multi_reduction <add>, %122, %cst_41 [1] : vector<8x32xf32> to vector<8xf32>
    %124 = vector.shape_cast %123 : vector<8xf32> to vector<8x1xf32>
    %cst_42 = arith.constant 3.200000e+01 : f32
    %125 = vector.broadcast %cst_42 : f32 to vector<8x1xf32>
    %126 = arith.divf %124, %125 : vector<8x1xf32>
    %127 = vector.broadcast %126 : vector<8x1xf32> to vector<8x32xf32>
    %128 = arith.subf %122, %127 : vector<8x32xf32>
    %129 = arith.mulf %128, %128 : vector<8x32xf32>
    %cst_43 = arith.constant dense<0.000000e+00> : vector<8xf32>
    %130 = vector.multi_reduction <add>, %129, %cst_43 [1] : vector<8x32xf32> to vector<8xf32>
    %131 = vector.shape_cast %130 : vector<8xf32> to vector<8x1xf32>
    %cst_44 = arith.constant 3.200000e+01 : f32
    %132 = vector.broadcast %cst_44 : f32 to vector<8x1xf32>
    %133 = arith.divf %131, %132 : vector<8x1xf32>
    %134 = vector.broadcast %126 : vector<8x1xf32> to vector<8x32xf32>
    %135 = arith.subf %122, %134 : vector<8x32xf32>
    %cst_45 = arith.constant 9.99999974E-6 : f32
    %136 = vector.broadcast %cst_45 : f32 to vector<8x1xf32>
    %137 = arith.addf %133, %136 : vector<8x1xf32>
    %138 = math.rsqrt %137 : vector<8x1xf32>
    %139 = vector.broadcast %138 : vector<8x1xf32> to vector<8x32xf32>
    %140 = arith.mulf %135, %139 : vector<8x32xf32>
    %141 = vector.broadcast %5 : vector<1x32xf32> to vector<8x32xf32>
    %142 = arith.mulf %140, %141 : vector<8x32xf32>
    %143 = vector.broadcast %6 : vector<1x32xf32> to vector<8x32xf32>
    %144 = arith.addf %142, %143 : vector<8x32xf32>
    %145 = arith.truncf %144 : vector<8x32xf32> to vector<8x32xbf16>
    %c0_46 = arith.constant 0 : index
    %c0_47 = arith.constant 0 : index
    %146 = vector.load %arg4[%c0_46, %c0_47] : memref<32x128xbf16, #tpu.memory_space<vmem>>, vector<32x128xbf16>
    %cst_48 = arith.constant dense<0.000000e+00> : vector<8x128xf32>
    %147 = tpu.matmul %145, %146, %cst_48 {dimension_numbers = #tpu.dot_dimension_numbers<[1], [0], [0], [1], [0, 0, 1, 1], [], []>} : vector<8x32xbf16>, vector<32x128xbf16>, vector<8x128xf32> -> vector<8x128xf32>
    %148 = vector.broadcast %8 : vector<1x128xf32> to vector<8x128xf32>
    %149 = arith.addf %147, %148 : vector<8x128xf32>
    %cst_49 = arith.constant 1.702000e+00 : f32
    %150 = vector.broadcast %cst_49 : f32 to vector<8x128xf32>
    %151 = arith.mulf %149, %150 : vector<8x128xf32>
    %152 = arith.negf %151 : vector<8x128xf32>
    %153 = math.exp %152 : vector<8x128xf32>
    %cst_50 = arith.constant 1.000000e+00 : f32
    %154 = vector.broadcast %cst_50 : f32 to vector<8x128xf32>
    %155 = arith.addf %154, %153 : vector<8x128xf32>
    %156 = arith.divf %154, %155 : vector<8x128xf32>
    %157 = arith.mulf %149, %156 : vector<8x128xf32>
    %158 = arith.truncf %157 : vector<8x128xf32> to vector<8x128xbf16>
    %c0_51 = arith.constant 0 : index
    %c0_52 = arith.constant 0 : index
    %159 = vector.load %arg5[%c0_51, %c0_52] : memref<128x32xbf16, #tpu.memory_space<vmem>>, vector<128x32xbf16>
    %cst_53 = arith.constant dense<0.000000e+00> : vector<8x32xf32>
    %160 = tpu.matmul %158, %159, %cst_53 {dimension_numbers = #tpu.dot_dimension_numbers<[1], [0], [0], [1], [0, 0, 1, 1], [], []>} : vector<8x128xbf16>, vector<128x32xbf16>, vector<8x32xf32> -> vector<8x32xf32>
    %161 = vector.broadcast %7 : vector<1x32xf32> to vector<8x32xf32>
    %162 = arith.addf %160, %161 : vector<8x32xf32>
    %163 = arith.addf %162, %122 : vector<8x32xf32>
    %c0_54 = arith.constant 0 : index
    %c0_55 = arith.constant 0 : index
    %c0_56 = arith.constant 0 : index
    %164 = vector.load %arg7[%c0_54, %c0_55, %c0_56] : memref<1x8x32xf32, #tpu.memory_space<vmem>>, vector<1x8x32xf32>
    %165 = vector.shape_cast %164 : vector<1x8x32xf32> to vector<8x32xf32>
    %166 = vector.shape_cast %163 : vector<8x32xf32> to vector<1x8x32xf32>
    tpu.vector_store %arg7[%c0_54, %c0_55, %c0_56], %166 {strides = array<i32>} : memref<1x8x32xf32, #tpu.memory_space<vmem>>, vector<1x8x32xf32>,
    return
  }
  func.func @transform_0(%arg0: i32) -> (i32, i32, i32) {
    %c0_i32 = arith.constant 0 : i32
    %c0_i32_0 = arith.constant 0 : i32
    %c0_i32_1 = arith.constant 0 : i32
    return %arg0, %c0_i32, %c0_i32_0 : i32, i32, i32
  }
  func.func @transform_1(%arg0: i32) -> (i32, i32) {
    %c0_i32 = arith.constant 0 : i32
    %c0_i32_0 = arith.constant 0 : i32
    %c0_i32_1 = arith.constant 0 : i32
    return %c0_i32, %c0_i32_0 : i32, i32
  }
  func.func @transform_2(%arg0: i32) -> (i32, i32) {
    %c0_i32 = arith.constant 0 : i32
    %c0_i32_0 = arith.constant 0 : i32
    %c0_i32_1 = arith.constant 0 : i32
    return %c0_i32, %c0_i32_0 : i32, i32
  }
  func.func @transform_3(%arg0: i32) -> (i32, i32) {
    %c0_i32 = arith.constant 0 : i32
    %c0_i32_0 = arith.constant 0 : i32
    %c0_i32_1 = arith.constant 0 : i32
    return %c0_i32, %c0_i32_0 : i32, i32
  }
  func.func @transform_4(%arg0: i32) -> (i32, i32) {
    %c0_i32 = arith.constant 0 : i32
    %c0_i32_0 = arith.constant 0 : i32
    %c0_i32_1 = arith.constant 0 : i32
    return %c0_i32, %c0_i32_0 : i32, i32
  }
  func.func @transform_5(%arg0: i32) -> (i32, i32) {
    %c0_i32 = arith.constant 0 : i32
    %c0_i32_0 = arith.constant 0 : i32
    %c0_i32_1 = arith.constant 0 : i32
    return %c0_i32, %c0_i32_0 : i32, i32
  }
  func.func @transform_6(%arg0: i32) -> (i32, i32, i32) {
    %c0_i32 = arith.constant 0 : i32
    %c0_i32_0 = arith.constant 0 : i32
    %c0_i32_1 = arith.constant 0 : i32
    return %arg0, %c0_i32, %c0_i32_0 : i32, i32, i32
  }
}

</mosaic_0001>

<llo_original>
// kernel: tpu_custom_call.1
$region0: #{tpu_custom_call.1}
  #allocation0 [shape = 'u32[]', space=smem, size = 0x4, offset = 0x4, fixed_abs, tag = 'smem constant byte address 0x4 - core index']
  #allocation1 [shape = 'u32[144,128]{1,0:T(1,128)}', space=vmem, size = 0x12000, scoped, tag = 'internal scratch']
  %s0 = inlined_call_operand.vmem [shape: f32[2,8,32], index: 0, kind: input, shape index: {}]
  %s1 = inlined_call_operand.vmem [shape: bf16[32,96], index: 1, kind: input, shape index: {}]
  %s2 = inlined_call_operand.vmem [shape: bf16[32,32], index: 2, kind: input, shape index: {}]
  %s3 = inlined_call_operand.vmem [shape: bf16[32,128], index: 3, kind: input, shape index: {}]
  %s4 = inlined_call_operand.vmem [shape: bf16[128,32], index: 4, kind: input, shape index: {}]
  %s5 = inlined_call_operand.vmem [shape: f32[8,128], index: 5, kind: input, shape index: {}]
  %s6 = inlined_call_operand.hbm [shape: f32[2,8,32], index: 6, kind: output, shape index: {}]
  %s7 = sld [smem:[#allocation0]]
  $region57: #{tpu_custom_call.1} parent=0
    _
  %s9 = ssub.s32 1, %s7
  %s10 = scalar_select 0, %s9, %s7
  $region1: #{tpu_custom_call.1} parent=0
    #allocation2 [shape = 'u8[8192]{0}', space=vmem, size = 0x2000, scoped, tag = 'output window, operand 0']
    #allocation3 [shape = 's32[2]{0}', space=sflag, size = 0x8, scoped, tag = 'scoped memory for tpu_custom_call.1']
    %11 = vsyncpa [#allocation3], 0
    %s12 = scalar_lea.sflag [#allocation3], 1
    %13 = vsyncpa %s12, 0
    loop: start=0, step=1, limit=4
    $region2: #{tpu_custom_call.1} parent=1 // loop_pre_header
      _
    $region3: #{tpu_custom_call.1} parent=1 // loop_header
      %s15 = sphi 0, %s19
      %p16 = scmp.ge.s32.totalorder %s15, 4
      %s25 = sphi 0, %s27
      %s28 = sphi 0, %s25
      %s29 = sphi 0, %s28
      %s45 = sphi 0, %s29
      %s49 = sphi 0, %s49
      %s51 = sphi 0, %s49
      %s52 = sphi 0, %s51
      %s66 = sphi 0, %s52
      %s70 = sphi 0, %s70
      %s72 = sphi 0, %s70
      %s73 = sphi 0, %s72
      %s87 = sphi 0, %s73
      %s91 = sphi 0, %s91
      %s93 = sphi 0, %s91
      %s94 = sphi 0, %s93
      %s108 = sphi 0, %s94
      %s112 = sphi 0, %s112
      %s114 = sphi 0, %s112
      %s115 = sphi 0, %s114
      %s129 = sphi 0, %s115
      %s133 = sphi 0, %s133
      %s135 = sphi 0, %s133
      %s136 = sphi 0, %s135
      %s150 = sphi 0, %s136
      %s156 = sphi 0, %s158
      %s159 = sphi 0, %s156
      %s160 = sphi 0, %s159
      %s176 = sphi 0, %s160
    $region4: #{tpu_custom_call.1} parent=1 // loop_header_branch
      %18 = sbr.rel (%p16) target = $region8
    $region5: #{tpu_custom_call.1} parent=1 // loop_body
      %s20 = ssub.s32 %s15, 1
      %s21 = ssub.s32 %s15, 2
      %s22 = sadd.s32 %s15, 1
      %s23 = ssub.s32 %s15, %s22
      %p24 = scmp.eq.s32.totalorder %s23, 0
      %s26 = sadd.s32 %s25, 1
      %s27 = scalar_select %p24, %s25, %s26
      %p30 = pneg %p24
      %p31 = scmp.eq.s32.totalorder %s15, 1
      %p32 = por %p30, %p31
      %p33 = scmp.ne.s32.totalorder %s25, %s28
      %p34 = scmp.eq.s32.totalorder %s15, 0
      %p35 = por %p33, %p34
      %p36 = scmp.ne.s32.totalorder %s25, %s28
      %p37 = scmp.eq.s32.totalorder %s20, 1
      %p38 = por %p36, %p37
      %p39 = scmp.ne.s32.totalorder %s28, %s29
      %p40 = scmp.eq.s32.totalorder %s20, 0
      %p41 = por %p39, %p40
      %p42 = scmp.ne.s32.totalorder %s28, %s29
      %p43 = scmp.eq.s32.totalorder %s21, 1
      %p44 = por %p42, %p43
      %p46 = scmp.ne.s32.totalorder %s29, %s45
      %p47 = scmp.eq.s32.totalorder %s21, 0
      %p48 = por %p46, %p47
      %s50 = sadd.s32 %s49, 1
      %p53 = scmp.eq.s32.totalorder %s15, 1
      %p54 = scmp.ne.s32.totalorder %s49, %s51
      %p55 = scmp.eq.s32.totalorder %s15, 0
      %p56 = por %p54, %p55
      %p57 = scmp.ne.s32.totalorder %s49, %s51
      %p58 = scmp.eq.s32.totalorder %s20, 1
      %p59 = por %p57, %p58
      %p60 = scmp.ne.s32.totalorder %s51, %s52
      %p61 = scmp.eq.s32.totalorder %s20, 0
      %p62 = por %p60, %p61
      %p63 = scmp.ne.s32.totalorder %s51, %s52
      %p64 = scmp.eq.s32.totalorder %s21, 1
      %p65 = por %p63, %p64
      %p67 = scmp.ne.s32.totalorder %s52, %s66
      %p68 = scmp.eq.s32.totalorder %s21, 0
      %p69 = por %p67, %p68
      %s71 = sadd.s32 %s70, 1
      %p74 = scmp.eq.s32.totalorder %s15, 1
      %p75 = scmp.ne.s32.totalorder %s70, %s72
      %p76 = scmp.eq.s32.totalorder %s15, 0
      %p77 = por %p75, %p76
      %p78 = scmp.ne.s32.totalorder %s70, %s72
      %p79 = scmp.eq.s32.totalorder %s20, 1
      %p80 = por %p78, %p79
      %p81 = scmp.ne.s32.totalorder %s72, %s73
      %p82 = scmp.eq.s32.totalorder %s20, 0
      %p83 = por %p81, %p82
      %p84 = scmp.ne.s32.totalorder %s72, %s73
      %p85 = scmp.eq.s32.totalorder %s21, 1
      %p86 = por %p84, %p85
      %p88 = scmp.ne.s32.totalorder %s73, %s87
      %p89 = scmp.eq.s32.totalorder %s21, 0
      %p90 = por %p88, %p89
      %s92 = sadd.s32 %s91, 1
      %p95 = scmp.eq.s32.totalorder %s15, 1
      %p96 = scmp.ne.s32.totalorder %s91, %s93
      %p97 = scmp.eq.s32.totalorder %s15, 0
      %p98 = por %p96, %p97
      %p99 = scmp.ne.s32.totalorder %s91, %s93
      %p100 = scmp.eq.s32.totalorder %s20, 1
      %p101 = por %p99, %p100
      %p102 = scmp.ne.s32.totalorder %s93, %s94
      %p103 = scmp.eq.s32.totalorder %s20, 0
      %p104 = por %p102, %p103
      %p105 = scmp.ne.s32.totalorder %s93, %s94
      %p106 = scmp.eq.s32.totalorder %s21, 1
      %p107 = por %p105, %p106
      %p109 = scmp.ne.s32.totalorder %s94, %s108
      %p110 = scmp.eq.s32.totalorder %s21, 0
      %p111 = por %p109, %p110
      %s113 = sadd.s32 %s112, 1
      %p116 = scmp.eq.s32.totalorder %s15, 1
      %p117 = scmp.ne.s32.totalorder %s112, %s114
      %p118 = scmp.eq.s32.totalorder %s15, 0
      %p119 = por %p117, %p118
      %p120 = scmp.ne.s32.totalorder %s112, %s114
      %p121 = scmp.eq.s32.totalorder %s20, 1
      %p122 = por %p120, %p121
      %p123 = scmp.ne.s32.totalorder %s114, %s115
      %p124 = scmp.eq.s32.totalorder %s20, 0
      %p125 = por %p123, %p124
      %p126 = scmp.ne.s32.totalorder %s114, %s115
      %p127 = scmp.eq.s32.totalorder %s21, 1
      %p128 = por %p126, %p127
      %p130 = scmp.ne.s32.totalorder %s115, %s129
      %p131 = scmp.eq.s32.totalorder %s21, 0
      %p132 = por %p130, %p131
      %s134 = sadd.s32 %s133, 1
      %p137 = scmp.eq.s32.totalorder %s15, 1
      %p138 = scmp.ne.s32.totalorder %s133, %s135
      %p139 = scmp.eq.s32.totalorder %s15, 0
      %p140 = por %p138, %p139
      %p141 = scmp.ne.s32.totalorder %s133, %s135
      %p142 = scmp.eq.s32.totalorder %s20, 1
      %p143 = por %p141, %p142
      %p144 = scmp.ne.s32.totalorder %s135, %s136
      %p145 = scmp.eq.s32.totalorder %s20, 0
      %p146 = por %p144, %p145
      %p147 = scmp.ne.s32.totalorder %s135, %s136
      %p148 = scmp.eq.s32.totalorder %s21, 1
      %p149 = por %p147, %p148
      %p151 = scmp.ne.s32.totalorder %s136, %s150
      %p152 = scmp.eq.s32.totalorder %s21, 0
      %p153 = por %p151, %p152
      %s154 = ssub.s32 %s15, %s22
      %p155 = scmp.eq.s32.totalorder %s154, 0
      %s157 = sadd.s32 %s156, 1
      %s158 = scalar_select %p155, %s156, %s157
      %p161 = pneg %p155
      %p162 = scmp.eq.s32.totalorder %s15, 1
      %p163 = por %p161, %p162
      %p164 = scmp.ne.s32.totalorder %s156, %s159
      %p165 = scmp.eq.s32.totalorder %s15, 0
      %p166 = por %p164, %p165
      %p167 = scmp.ne.s32.totalorder %s156, %s159
      %p168 = scmp.eq.s32.totalorder %s20, 1
      %p169 = por %p167, %p168
      %p170 = scmp.ne.s32.totalorder %s159, %s160
      %p171 = scmp.eq.s32.totalorder %s20, 0
      %p172 = por %p170, %p171
      %p173 = scmp.ne.s32.totalorder %s159, %s160
      %p174 = scmp.eq.s32.totalorder %s21, 1
      %p175 = por %p173, %p174
      %p177 = scmp.ne.s32.totalorder %s160, %s176
      %p178 = scmp.eq.s32.totalorder %s21, 0
      %p179 = por %p177, %p178
      %p180 = scmp.le.s32.totalorder 1, %s15
      %p181 = scmp.lt.s32.totalorder %s15, 3
      %p182 = pnand %p180, %p181
      %p183 = pneg %p182
      // Predicated region
      $region9: #{tpu_custom_call.1} parent=5 // pred_check
        _
      $region10: #{tpu_custom_call.1} parent=5 // pred_check_branch
        %185 = sbr.rel (%p182) target = $region12
      $region11: #{tpu_custom_call.1} parent=5 // pred_region
        %s186 = ssub.s32 %s15, 1
        // Predicated region
        $region13: #{tpu_custom_call.1} parent=11 // pred_check
          %p187 = pneg %p62
        $region14: #{tpu_custom_call.1} parent=11 // pred_check_branch
          %189 = sbr.rel (%p187) target = $region16
        $region15: #{tpu_custom_call.1} parent=11 // pred_region
          _
        $region16: #{tpu_custom_call.1} parent=11 // pred_fallthru
          _
        // Predicated region
        $region17: #{tpu_custom_call.1} parent=11 // pred_check
          %p190 = pneg %p83
        $region18: #{tpu_custom_call.1} parent=11 // pred_check_branch
          %192 = sbr.rel (%p190) target = $region20
        $region19: #{tpu_custom_call.1} parent=11 // pred_region
          _
        $region20: #{tpu_custom_call.1} parent=11 // pred_fallthru
          _
        // Predicated region
        $region21: #{tpu_custom_call.1} parent=11 // pred_check
          %p193 = pneg %p104
        $region22: #{tpu_custom_call.1} parent=11 // pred_check_branch
          %195 = sbr.rel (%p193) target = $region24
        $region23: #{tpu_custom_call.1} parent=11 // pred_region
          _
        $region24: #{tpu_custom_call.1} parent=11 // pred_fallthru
          _
        // Predicated region
        $region25: #{tpu_custom_call.1} parent=11 // pred_check
          %p196 = pneg %p125
        $region26: #{tpu_custom_call.1} parent=11 // pred_check_branch
          %198 = sbr.rel (%p196) target = $region28
        $region27: #{tpu_custom_call.1} parent=11 // pred_region
          _
        $region28: #{tpu_custom_call.1} parent=11 // pred_fallthru
          _
        // Predicated region
        $region29: #{tpu_custom_call.1} parent=11 // pred_check
          %p199 = pneg %p146
        $region30: #{tpu_custom_call.1} parent=11 // pred_check_branch
          %201 = sbr.rel (%p199) target = $region32
        $region31: #{tpu_custom_call.1} parent=11 // pred_region
          _
        $region32: #{tpu_custom_call.1} parent=11 // pred_fallthru
          _
      $region12: #{tpu_custom_call.1} parent=5 // pred_fallthru
        _
      %p202 = scmp.lt.s32.totalorder %s15, 2
      // Predicated region
      $region33: #{tpu_custom_call.1} parent=5 // pred_check
        %p203 = pneg %p202
      $region34: #{tpu_custom_call.1} parent=5 // pred_check_branch
        %205 = sbr.rel (%p203) target = $region36
      $region35: #{tpu_custom_call.1} parent=5 // pred_region
        // Predicated region
        $region37: #{tpu_custom_call.1} parent=35 // pred_check
          %p206 = pneg %p35
        $region38: #{tpu_custom_call.1} parent=35 // pred_check_branch
          %208 = sbr.rel (%p206) target = $region40
        $region39: #{tpu_custom_call.1} parent=35 // pred_region
          %p209 = scmp.lt.s32.totalorder %s15, 1
          %s210 = scalar_select %p209, %s15, 1
          %s211 = smul.addr %s210, 8
          %s212 = scalar_lea.vmem %s0, %s211
        $region40: #{tpu_custom_call.1} parent=35 // pred_fallthru
          _
      $region36: #{tpu_custom_call.1} parent=5 // pred_fallthru
        _
      %p213 = scmp.le.s32.totalorder 1, %s15
      %p214 = scmp.lt.s32.totalorder %s15, 3
      %p215 = pnand %p213, %p214
      %p216 = pneg %p215
      // Predicated region
      $region41: #{tpu_custom_call.1} parent=5 // pred_check
        _
      $region42: #{tpu_custom_call.1} parent=5 // pred_check_branch
        %218 = sbr.rel (%p215) target = $region44
      $region43: #{tpu_custom_call.1} parent=5 // pred_region
        %s219 = ssub.s32 %s15, 1
        %p220 = scmp.lt.s32.totalorder %s20, 1
        %s221 = scalar_select %p220, %s20, 1
        %s222 = smul.addr %s221, 8
        %s223 = scalar_lea.vmem %s0, %s222
        %p224 = pneg %p41
        %p225 = pneg %p38
        %p226 = pneg %p62
        %p227 = pneg %p59
        %p228 = pneg %p83
        %p229 = pneg %p80
        %p230 = pneg %p104
        %p231 = pneg %p101
        %p232 = pneg %p125
        %p233 = pneg %p122
        %p234 = pneg %p146
        %p235 = pneg %p143
        %p236 = pneg %p172
        %p237 = pneg %p169
        %s238 = sand.u32 %s159, 1
        %s239 = scalar_lea.sflag [#allocation3], %s238
        %s240 = sand.u32 %s159, 1
        %s241 = smul.addr %s240, 8
        %s242 = scalar_lea.vmem [#allocation2], %s241
        %p243 = scmp.lt.s32.totalorder %s20, 1
        %s244 = scalar_select %p243, %s20, 1
        %s245 = smul.addr %s244, 8
        %s246 = scalar_lea.vmem %s0, %s245
        %v248 = vld [vmem:[%s246] sm:$0xff]
        %v249 = vld [vmem:[%s5] sm:$0x1]
        %v250 = vld [vmem:[%s5 + $0x1] sm:$0x1]
        %v251 = vld [vmem:[%s5 + $0x2] sm:$0x1]
        %v252 = vld [vmem:[%s5 + $0x3] sm:$0x1]
        %v253 = vld [vmem:[%s5 + $0x4] sm:$0x1]
        %v254 = vld [vmem:[%s5 + $0x5] sm:$0x1]
        %v255 = vld [vmem:[%s5 + $0x6] sm:$0x1]
        %v256 = vld [vmem:[%s5 + $0x7] sm:$0x1]
        %vm257 = vcmask 261120
        %v258 = vsel %vm257, %v248, 0.0
        %259 = vadd.xlane.f32.xlu0 %v258
        %v260 = vpop.xlane.xlu0 %259
        %v261 = vrcp.pop 32.0
        %v262 = vmul.f32 %v260, %v261
        %v263 = vsub.f32 %v248, %v262
        %v264 = vmul.f32 %v263, %v263
        %v265 = vsel %vm257, %v264, 0.0
        %266 = vadd.xlane.f32.xlu0 %v265
        %v267 = vpop.xlane.xlu0 %266
        %v268 = vmul.f32 %v267, %v261
        %v269 = vadd.f32 %v268, 1e-05
        %v270 = vrsqrt.pop %v269
        %v271 = vmul.f32 %v263, %v270
        %v272 = vlaneseq
        %v273 = vshrl.u32 %v272, 7
        %v274 = vsub.s32 0, %v273
        %v275 = vrot.slane %v249, %v274
        %v276 = vmul.f32 %v271, %v275
        %v277 = vlaneseq
        %v278 = vshrl.u32 %v277, 7
        %v279 = vsub.s32 0, %v278
        %v280 = vrot.slane %v250, %v279
        %v281 = vadd.f32 %v276, %v280
        %v282 = vpack.c.bf16 %v281, %v281
        %v283 = vld [vmem:[%s1] sm:$0xf]
        %v284 = vld [vmem:[%s1 + $0x4] sm:$0xf]
        %v285 = vld [vmem:[%s1 + $0x8] sm:$0xf]
        %v286 = vld [vmem:[%s1 + $0xc] sm:$0xf]
        %v287 = vlaneseq
        %v288 = vshrl.u32 %v287, 7
        %v289 = vsub.s32 0, %v288
        %v290 = vrot.slane %v256, %v289
        %v295 = vunpack.c.l.b16 %v283
        %v296 = vunpack.c.l.b16 %v284
        %v297 = vunpack.c.l.b16 %v285
        %v298 = vunpack.c.l.b16 %v286
        %v299 = vpack.c.b16 %v296, %v295
        %v300 = vpack.c.b16 %v298, %v297
        %v304 = vsel %vm257, %v282, 0
        %306 = vmatprep.subr.bf16.mxu0 0
        %307 = vmatpush1.bf16.msra.mxu0 0
        %308 = vmatprep.subr.bf16.mxu0 0
        %309 = vmatpush1.bf16.msra.mxu0 0
        %310 = vmatprep.subr.bf16.mxu0 0
        %311 = vmatpush1.bf16.msra.mxu0 0
        %312 = vmatprep.subr.bf16.mxu0 0
        %313 = vmatpush1.bf16.msra.mxu0 0
        %314 = vmatprep.subr.bf16.mxu0 0
        %315 = vmatpush1.bf16.msra.mxu0 0
        %316 = vmatprep.subr.bf16.mxu0 0
        %317 = vmatpush1.bf16.msra.mxu0 0
        %318 = vmatprep.subr.bf16.mxu0 0
        %319 = vmatpush1.bf16.msra.mxu0 %v300
        %320 = vmatprep.subr.bf16.mxu0 0
        %321 = vmatpush1.bf16.msra.mxu0 %v299
        %322 = vmatprep.subr.bf16.mxu0 0
        %323 = vmatpush2.bf16.msra.mxu0 0
        %324 = vmatprep.subr.bf16.mxu0 0
        %325 = vmatpush2.bf16.msra.mxu0 0
        %326 = vmatprep.subr.bf16.mxu0 0
        %327 = vmatpush2.bf16.msra.mxu0 0
        %328 = vmatprep.subr.bf16.mxu0 0
        %329 = vmatpush2.bf16.msra.mxu0 0
        %330 = vmatprep.subr.bf16.mxu0 0
        %331 = vmatpush2.bf16.msra.mxu0 0
        %332 = vmatprep.subr.bf16.mxu0 0
        %333 = vmatpush2.bf16.msra.mxu0 0
        %334 = vmatprep.subr.bf16.mxu0 0
        %335 = vmatpush2.bf16.msra.mxu0 0
        %336 = vmatprep.subr.bf16.mxu0 0
        %337 = vmatpush2.bf16.msra.mxu0 0
        %338 = vmatprep.mubr.bf16.mxu0 0
        %339 = vmatmul.mubr.bf16.gmra.mxu0 %v304
        %v340 = vpop.f32.mrf.mxu0
        %v341 = vadd.f32 %v290, %v340
        %v342 = vpop.f32.mrf.mxu0
        %v343 = vpop.f32.mrf.mxu0
        %v344 = vpop.f32.mrf.mxu0
        %345 = vdwg.mxu0
        %v346 = vpack.c.bf16 %v341, %v341
        %v347 = vlaneseq
        %v348 = vshrl.u32 %v347, 7
        %v349 = vlaneseq
        %v350 = vand.u32 %v349, 127
        %vm351 = vcmp.le.s32.totalorder %v350, %v348
        %353 = vrot.lane.b32.xlu0 %v346, 96
        %v354 = vpop.permute.xlu0 %353
        %vm355 = vcmask 64512
        %v357 = vsel %vm355, %v346, 0
        %v360 = vsel %vm355, %v354, 0
        %362 = vmatprep.subr.bf16.mxu0 0
        %363 = vmatpush1.bf16.xpose.msra.mxu0 0
        %364 = vmatprep.subr.bf16.mxu0 0
        %365 = vmatpush1.bf16.xpose.msra.mxu0 0
        %366 = vmatprep.subr.bf16.mxu0 0
        %367 = vmatpush1.bf16.xpose.msra.mxu0 0
        %368 = vmatprep.subr.bf16.mxu0 0
        %369 = vmatpush1.bf16.xpose.msra.mxu0 0
        %370 = vmatprep.subr.bf16.mxu0 0
        %371 = vmatpush1.bf16.xpose.msra.mxu0 0
        %372 = vmatprep.subr.bf16.mxu0 0
        %373 = vmatpush1.bf16.xpose.msra.mxu0 0
        %374 = vmatprep.subr.bf16.mxu0 0
        %375 = vmatpush1.bf16.xpose.msra.mxu0 0
        %376 = vmatprep.subr.bf16.mxu0 0
        %377 = vmatpush1.bf16.xpose.msra.mxu0 %v360
        %378 = vmatprep.subr.bf16.mxu0 0
        %379 = vmatpush2.bf16.xpose.msra.mxu0 0
        %380 = vmatprep.subr.bf16.mxu0 0
        %381 = vmatpush2.bf16.xpose.msra.mxu0 0
        %382 = vmatprep.subr.bf16.mxu0 0
        %383 = vmatpush2.bf16.xpose.msra.mxu0 0
        %384 = vmatprep.subr.bf16.mxu0 0
        %385 = vmatpush2.bf16.xpose.msra.mxu0 0
        %386 = vmatprep.subr.bf16.mxu0 0
        %387 = vmatpush2.bf16.xpose.msra.mxu0 0
        %388 = vmatprep.subr.bf16.mxu0 0
        %389 = vmatpush2.bf16.xpose.msra.mxu0 0
        %390 = vmatprep.subr.bf16.mxu0 0
        %391 = vmatpush2.bf16.xpose.msra.mxu0 0
        %392 = vmatprep.subr.bf16.mxu0 0
        %393 = vmatpush2.bf16.xpose.msra.mxu0 0
        %394 = vmatprep.mubr.bf16.mxu0 0
        %395 = vmatmul.mubr.bf16.gmra.mxu0 %v357
        %v396 = vpop.f32.mrf.mxu0
        %v397 = vadd.f32 0.0, %v396
        %v398 = vpop.f32.mrf.mxu0
        %v399 = vpop.f32.mrf.mxu0
        %v400 = vpop.f32.mrf.mxu0
        %401 = vdwg.mxu0
        %v402 = vsel %vm351, %v397, -1e+30
        %v403 = vsel %vm355, %v402, -inf
        %404 = vmax.xlane.f32.xlu0 %v403
        %v405 = vpop.xlane.xlu0 %404
        %v406 = vsub.f32 %v402, %v405
        %v407 = vmul.f32 %v406, 1.442695
        %v408 = vpow.pop %v407
        %v409 = vsel %vm355, %v408, 0.0
        %410 = vadd.xlane.f32.xlu0 %v409
        %v411 = vpop.xlane.xlu0 %410
        %v412 = vpack.c.bf16 %v408, %v408
        %413 = vrot.lane.b32.xlu0 %v346, 64
        %v414 = vpop.permute.xlu0 %413
        %v416 = vsel %vm355, %v412, 0
        %vm418 = vcmask 1043456
        %v420 = vsel %vm418, %v414, 0
        %422 = vmatprep.subr.bf16.mxu0 0
        %423 = vmatpush1.bf16.msra.mxu0 0
        %424 = vmatprep.subr.bf16.mxu0 0
        %425 = vmatpush1.bf16.msra.mxu0 0
        %426 = vmatprep.subr.bf16.mxu0 0
        %427 = vmatpush1.bf16.msra.mxu0 0
        %428 = vmatprep.subr.bf16.mxu0 0
        %429 = vmatpush1.bf16.msra.mxu0 0
        %430 = vmatprep.subr.bf16.mxu0 0
        %431 = vmatpush1.bf16.msra.mxu0 0
        %432 = vmatprep.subr.bf16.mxu0 0
        %433 = vmatpush1.bf16.msra.mxu0 0
        %434 = vmatprep.subr.bf16.mxu0 0
        %435 = vmatpush1.bf16.msra.mxu0 0
        %436 = vmatprep.subr.bf16.mxu0 0
        %437 = vmatpush1.bf16.msra.mxu0 %v420
        %438 = vmatprep.subr.bf16.mxu0 0
        %439 = vmatpush2.bf16.msra.mxu0 0
        %440 = vmatprep.subr.bf16.mxu0 0
        %441 = vmatpush2.bf16.msra.mxu0 0
        %442 = vmatprep.subr.bf16.mxu0 0
        %443 = vmatpush2.bf16.msra.mxu0 0
        %444 = vmatprep.subr.bf16.mxu0 0
        %445 = vmatpush2.bf16.msra.mxu0 0
        %446 = vmatprep.subr.bf16.mxu0 0
        %447 = vmatpush2.bf16.msra.mxu0 0
        %448 = vmatprep.subr.bf16.mxu0 0
        %449 = vmatpush2.bf16.msra.mxu0 0
        %450 = vmatprep.subr.bf16.mxu0 0
        %451 = vmatpush2.bf16.msra.mxu0 0
        %452 = vmatprep.subr.bf16.mxu0 0
        %453 = vmatpush2.bf16.msra.mxu0 0
        %454 = vmatprep.mubr.bf16.mxu0 0
        %455 = vmatmul.mubr.bf16.gmra.mxu0 %v416
        %v456 = vpop.f32.mrf.mxu0
        %v457 = vadd.f32 0.0, %v456
        %v458 = vpop.f32.mrf.mxu0
        %v459 = vpop.f32.mrf.mxu0
        %v460 = vpop.f32.mrf.mxu0
        %461 = vdwg.mxu0
        %v462 = vrcp.pop %v411
        %v463 = vmul.f32 %v457, %v462
        %v464 = vpack.c.bf16 %v463, %v463
        %465 = vrot.lane.b32.xlu0 %v346, 120
        %v466 = vpop.permute.xlu0 %465
        %467 = vrot.lane.b32.xlu0 %v346, 88
        %v468 = vpop.permute.xlu0 %467
        %v470 = vsel %vm355, %v466, 0
        %v473 = vsel %vm355, %v468, 0
        %475 = vmatprep.subr.bf16.mxu0 0
        %476 = vmatpush1.bf16.xpose.msra.mxu0 0
        %477 = vmatprep.subr.bf16.mxu0 0
        %478 = vmatpush1.bf16.xpose.msra.mxu0 0
        %479 = vmatprep.subr.bf16.mxu0 0
        %480 = vmatpush1.bf16.xpose.msra.mxu0 0
        %481 = vmatprep.subr.bf16.mxu0 0
        %482 = vmatpush1.bf16.xpose.msra.mxu0 0
        %483 = vmatprep.subr.bf16.mxu0 0
        %484 = vmatpush1.bf16.xpose.msra.mxu0 0
        %485 = vmatprep.subr.bf16.mxu0 0
        %486 = vmatpush1.bf16.xpose.msra.mxu0 0
        %487 = vmatprep.subr.bf16.mxu0 0
        %488 = vmatpush1.bf16.xpose.msra.mxu0 0
        %489 = vmatprep.subr.bf16.mxu0 0
        %490 = vmatpush1.bf16.xpose.msra.mxu0 %v473
        %491 = vmatprep.subr.bf16.mxu0 0
        %492 = vmatpush2.bf16.xpose.msra.mxu0 0
        %493 = vmatprep.subr.bf16.mxu0 0
        %494 = vmatpush2.bf16.xpose.msra.mxu0 0
        %495 = vmatprep.subr.bf16.mxu0 0
        %496 = vmatpush2.bf16.xpose.msra.mxu0 0
        %497 = vmatprep.subr.bf16.mxu0 0
        %498 = vmatpush2.bf16.xpose.msra.mxu0 0
        %499 = vmatprep.subr.bf16.mxu0 0
        %500 = vmatpush2.bf16.xpose.msra.mxu0 0
        %501 = vmatprep.subr.bf16.mxu0 0
        %502 = vmatpush2.bf16.xpose.msra.mxu0 0
        %503 = vmatprep.subr.bf16.mxu0 0
        %504 = vmatpush2.bf16.xpose.msra.mxu0 0
        %505 = vmatprep.subr.bf16.mxu0 0
        %506 = vmatpush2.bf16.xpose.msra.mxu0 0
        %507 = vmatprep.mubr.bf16.mxu0 0
        %508 = vmatmul.mubr.bf16.gmra.mxu0 %v470
        %v509 = vpop.f32.mrf.mxu0
        %v510 = vadd.f32 0.0, %v509
        %v511 = vpop.f32.mrf.mxu0
        %v512 = vpop.f32.mrf.mxu0
        %v513 = vpop.f32.mrf.mxu0
        %514 = vdwg.mxu0
        %v515 = vsel %vm351, %v510, -1e+30
        %v516 = vsel %vm355, %v515, -inf
        %517 = vmax.xlane.f32.xlu0 %v516
        %v518 = vpop.xlane.xlu0 %517
        %v519 = vsub.f32 %v515, %v518
        %v520 = vmul.f32 %v519, 1.442695
        %v521 = vpow.pop %v520
        %v522 = vsel %vm355, %v521, 0.0
        %523 = vadd.xlane.f32.xlu0 %v522
        %v524 = vpop.xlane.xlu0 %523
        %v525 = vpack.c.bf16 %v521, %v521
        %526 = vrot.lane.b32.xlu0 %v346, 56
        %v527 = vpop.permute.xlu0 %526
        %v529 = vsel %vm355, %v525, 0
        %v532 = vsel %vm418, %v527, 0
        %534 = vmatprep.subr.bf16.mxu0 0
        %535 = vmatpush1.bf16.msra.mxu0 0
        %536 = vmatprep.subr.bf16.mxu0 0
        %537 = vmatpush1.bf16.msra.mxu0 0
        %538 = vmatprep.subr.bf16.mxu0 0
        %539 = vmatpush1.bf16.msra.mxu0 0
        %540 = vmatprep.subr.bf16.mxu0 0
        %541 = vmatpush1.bf16.msra.mxu0 0
        %542 = vmatprep.subr.bf16.mxu0 0
        %543 = vmatpush1.bf16.msra.mxu0 0
        %544 = vmatprep.subr.bf16.mxu0 0
        %545 = vmatpush1.bf16.msra.mxu0 0
        %546 = vmatprep.subr.bf16.mxu0 0
        %547 = vmatpush1.bf16.msra.mxu0 0
        %548 = vmatprep.subr.bf16.mxu0 0
        %549 = vmatpush1.bf16.msra.mxu0 %v532
        %550 = vmatprep.subr.bf16.mxu0 0
        %551 = vmatpush2.bf16.msra.mxu0 0
        %552 = vmatprep.subr.bf16.mxu0 0
        %553 = vmatpush2.bf16.msra.mxu0 0
        %554 = vmatprep.subr.bf16.mxu0 0
        %555 = vmatpush2.bf16.msra.mxu0 0
        %556 = vmatprep.subr.bf16.mxu0 0
        %557 = vmatpush2.bf16.msra.mxu0 0
        %558 = vmatprep.subr.bf16.mxu0 0
        %559 = vmatpush2.bf16.msra.mxu0 0
        %560 = vmatprep.subr.bf16.mxu0 0
        %561 = vmatpush2.bf16.msra.mxu0 0
        %562 = vmatprep.subr.bf16.mxu0 0
        %563 = vmatpush2.bf16.msra.mxu0 0
        %564 = vmatprep.subr.bf16.mxu0 0
        %565 = vmatpush2.bf16.msra.mxu0 0
        %566 = vmatprep.mubr.bf16.mxu0 0
        %567 = vmatmul.mubr.bf16.gmra.mxu0 %v529
        %v568 = vpop.f32.mrf.mxu0
        %v569 = vadd.f32 0.0, %v568
        %v570 = vpop.f32.mrf.mxu0
        %v571 = vpop.f32.mrf.mxu0
        %v572 = vpop.f32.mrf.mxu0
        %573 = vdwg.mxu0
        %v574 = vrcp.pop %v524
        %v575 = vmul.f32 %v569, %v574
        %v576 = vpack.c.bf16 %v575, %v575
        %577 = vrot.lane.b32.xlu0 %v346, 112
        %v578 = vpop.permute.xlu0 %577
        %579 = vrot.lane.b32.xlu0 %v346, 80
        %v580 = vpop.permute.xlu0 %579
        %v582 = vsel %vm355, %v578, 0
        %v585 = vsel %vm355, %v580, 0
        %587 = vmatprep.subr.bf16.mxu0 0
        %588 = vmatpush1.bf16.xpose.msra.mxu0 0
        %589 = vmatprep.subr.bf16.mxu0 0
        %590 = vmatpush1.bf16.xpose.msra.mxu0 0
        %591 = vmatprep.subr.bf16.mxu0 0
        %592 = vmatpush1.bf16.xpose.msra.mxu0 0
        %593 = vmatprep.subr.bf16.mxu0 0
        %594 = vmatpush1.bf16.xpose.msra.mxu0 0
        %595 = vmatprep.subr.bf16.mxu0 0
        %596 = vmatpush1.bf16.xpose.msra.mxu0 0
        %597 = vmatprep.subr.bf16.mxu0 0
        %598 = vmatpush1.bf16.xpose.msra.mxu0 0
        %599 = vmatprep.subr.bf16.mxu0 0
        %600 = vmatpush1.bf16.xpose.msra.mxu0 0
        %601 = vmatprep.subr.bf16.mxu0 0
        %602 = vmatpush1.bf16.xpose.msra.mxu0 %v585
        %603 = vmatprep.subr.bf16.mxu0 0
        %604 = vmatpush2.bf16.xpose.msra.mxu0 0
        %605 = vmatprep.subr.bf16.mxu0 0
        %606 = vmatpush2.bf16.xpose.msra.mxu0 0
        %607 = vmatprep.subr.bf16.mxu0 0
        %608 = vmatpush2.bf16.xpose.msra.mxu0 0
        %609 = vmatprep.subr.bf16.mxu0 0
        %610 = vmatpush2.bf16.xpose.msra.mxu0 0
        %611 = vmatprep.subr.bf16.mxu0 0
        %612 = vmatpush2.bf16.xpose.msra.mxu0 0
        %613 = vmatprep.subr.bf16.mxu0 0
        %614 = vmatpush2.bf16.xpose.msra.mxu0 0
        %615 = vmatprep.subr.bf16.mxu0 0
        %616 = vmatpush2.bf16.xpose.msra.mxu0 0
        %617 = vmatprep.subr.bf16.mxu0 0
        %618 = vmatpush2.bf16.xpose.msra.mxu0 0
        %619 = vmatprep.mubr.bf16.mxu0 0
        %620 = vmatmul.mubr.bf16.gmra.mxu0 %v582
        %v621 = vpop.f32.mrf.mxu0
        %v622 = vadd.f32 0.0, %v621
        %v623 = vpop.f32.mrf.mxu0
        %v624 = vpop.f32.mrf.mxu0
        %v625 = vpop.f32.mrf.mxu0
        %626 = vdwg.mxu0
        %v627 = vsel %vm351, %v622, -1e+30
        %v628 = vsel %vm355, %v627, -inf
        %629 = vmax.xlane.f32.xlu0 %v628
        %v630 = vpop.xlane.xlu0 %629
        %v631 = vsub.f32 %v627, %v630
        %v632 = vmul.f32 %v631, 1.442695
        %v633 = vpow.pop %v632
        %v634 = vsel %vm355, %v633, 0.0
        %635 = vadd.xlane.f32.xlu0 %v634
        %v636 = vpop.xlane.xlu0 %635
        %v637 = vpack.c.bf16 %v633, %v633
        %638 = vrot.lane.b32.xlu0 %v346, 48
        %v639 = vpop.permute.xlu0 %638
        %v641 = vsel %vm355, %v637, 0
        %v644 = vsel %vm418, %v639, 0
        %646 = vmatprep.subr.bf16.mxu0 0
        %647 = vmatpush1.bf16.msra.mxu0 0
        %648 = vmatprep.subr.bf16.mxu0 0
        %649 = vmatpush1.bf16.msra.mxu0 0
        %650 = vmatprep.subr.bf16.mxu0 0
        %651 = vmatpush1.bf16.msra.mxu0 0
        %652 = vmatprep.subr.bf16.mxu0 0
        %653 = vmatpush1.bf16.msra.mxu0 0
        %654 = vmatprep.subr.bf16.mxu0 0
        %655 = vmatpush1.bf16.msra.mxu0 0
        %656 = vmatprep.subr.bf16.mxu0 0
        %657 = vmatpush1.bf16.msra.mxu0 0
        %658 = vmatprep.subr.bf16.mxu0 0
        %659 = vmatpush1.bf16.msra.mxu0 0
        %660 = vmatprep.subr.bf16.mxu0 0
        %661 = vmatpush1.bf16.msra.mxu0 %v644
        %662 = vmatprep.subr.bf16.mxu0 0
        %663 = vmatpush2.bf16.msra.mxu0 0
        %664 = vmatprep.subr.bf16.mxu0 0
        %665 = vmatpush2.bf16.msra.mxu0 0
        %666 = vmatprep.subr.bf16.mxu0 0
        %667 = vmatpush2.bf16.msra.mxu0 0
        %668 = vmatprep.subr.bf16.mxu0 0
        %669 = vmatpush2.bf16.msra.mxu0 0
        %670 = vmatprep.subr.bf16.mxu0 0
        %671 = vmatpush2.bf16.msra.mxu0 0
        %672 = vmatprep.subr.bf16.mxu0 0
        %673 = vmatpush2.bf16.msra.mxu0 0
        %674 = vmatprep.subr.bf16.mxu0 0
        %675 = vmatpush2.bf16.msra.mxu0 0
        %676 = vmatprep.subr.bf16.mxu0 0
        %677 = vmatpush2.bf16.msra.mxu0 0
        %678 = vmatprep.mubr.bf16.mxu0 0
        %679 = vmatmul.mubr.bf16.gmra.mxu0 %v641
        %v680 = vpop.f32.mrf.mxu0
        %v681 = vadd.f32 0.0, %v680
        %v682 = vpop.f32.mrf.mxu0
        %v683 = vpop.f32.mrf.mxu0
        %v684 = vpop.f32.mrf.mxu0
        %685 = vdwg.mxu0
        %v686 = vrcp.pop %v636
        %v687 = vmul.f32 %v681, %v686
        %v688 = vpack.c.bf16 %v687, %v687
        %689 = vrot.lane.b32.xlu0 %v346, 104
        %v690 = vpop.permute.xlu0 %689
        %691 = vrot.lane.b32.xlu0 %v346, 72
        %v692 = vpop.permute.xlu0 %691
        %v694 = vsel %vm355, %v690, 0
        %v697 = vsel %vm355, %v692, 0
        %699 = vmatprep.subr.bf16.mxu0 0
        %700 = vmatpush1.bf16.xpose.msra.mxu0 0
        %701 = vmatprep.subr.bf16.mxu0 0
        %702 = vmatpush1.bf16.xpose.msra.mxu0 0
        %703 = vmatprep.subr.bf16.mxu0 0
        %704 = vmatpush1.bf16.xpose.msra.mxu0 0
        %705 = vmatprep.subr.bf16.mxu0 0
        %706 = vmatpush1.bf16.xpose.msra.mxu0 0
        %707 = vmatprep.subr.bf16.mxu0 0
        %708 = vmatpush1.bf16.xpose.msra.mxu0 0
        %709 = vmatprep.subr.bf16.mxu0 0
        %710 = vmatpush1.bf16.xpose.msra.mxu0 0
        %711 = vmatprep.subr.bf16.mxu0 0
        %712 = vmatpush1.bf16.xpose.msra.mxu0 0
        %713 = vmatprep.subr.bf16.mxu0 0
        %714 = vmatpush1.bf16.xpose.msra.mxu0 %v697
        %715 = vmatprep.subr.bf16.mxu0 0
        %716 = vmatpush2.bf16.xpose.msra.mxu0 0
        %717 = vmatprep.subr.bf16.mxu0 0
        %718 = vmatpush2.bf16.xpose.msra.mxu0 0
        %719 = vmatprep.subr.bf16.mxu0 0
        %720 = vmatpush2.bf16.xpose.msra.mxu0 0
        %721 = vmatprep.subr.bf16.mxu0 0
        %722 = vmatpush2.bf16.xpose.msra.mxu0 0
        %723 = vmatprep.subr.bf16.mxu0 0
        %724 = vmatpush2.bf16.xpose.msra.mxu0 0
        %725 = vmatprep.subr.bf16.mxu0 0
        %726 = vmatpush2.bf16.xpose.msra.mxu0 0
        %727 = vmatprep.subr.bf16.mxu0 0
        %728 = vmatpush2.bf16.xpose.msra.mxu0 0
        %729 = vmatprep.subr.bf16.mxu0 0
        %730 = vmatpush2.bf16.xpose.msra.mxu0 0
        %731 = vmatprep.mubr.bf16.mxu0 0
        %732 = vmatmul.mubr.bf16.gmra.mxu0 %v694
        %v733 = vpop.f32.mrf.mxu0
        %v734 = vadd.f32 0.0, %v733
        %v735 = vpop.f32.mrf.mxu0
        %v736 = vpop.f32.mrf.mxu0
        %v737 = vpop.f32.mrf.mxu0
        %738 = vdwg.mxu0
        %v739 = vsel %vm351, %v734, -1e+30
        %v740 = vsel %vm355, %v739, -inf
        %741 = vmax.xlane.f32.xlu0 %v740
        %v742 = vpop.xlane.xlu0 %741
        %v743 = vsub.f32 %v739, %v742
        %v744 = vmul.f32 %v743, 1.442695
        %v745 = vpow.pop %v744
        %v746 = vsel %vm355, %v745, 0.0
        %747 = vadd.xlane.f32.xlu0 %v746
        %v748 = vpop.xlane.xlu0 %747
        %v749 = vpack.c.bf16 %v745, %v745
        %750 = vrot.lane.b32.xlu0 %v346, 40
        %v751 = vpop.permute.xlu0 %750
        %v753 = vsel %vm355, %v749, 0
        %v756 = vsel %vm418, %v751, 0
        %758 = vmatprep.subr.bf16.mxu0 0
        %759 = vmatpush1.bf16.msra.mxu0 0
        %760 = vmatprep.subr.bf16.mxu0 0
        %761 = vmatpush1.bf16.msra.mxu0 0
        %762 = vmatprep.subr.bf16.mxu0 0
        %763 = vmatpush1.bf16.msra.mxu0 0
        %764 = vmatprep.subr.bf16.mxu0 0
        %765 = vmatpush1.bf16.msra.mxu0 0
        %766 = vmatprep.subr.bf16.mxu0 0
        %767 = vmatpush1.bf16.msra.mxu0 0
        %768 = vmatprep.subr.bf16.mxu0 0
        %769 = vmatpush1.bf16.msra.mxu0 0
        %770 = vmatprep.subr.bf16.mxu0 0
        %771 = vmatpush1.bf16.msra.mxu0 0
        %772 = vmatprep.subr.bf16.mxu0 0
        %773 = vmatpush1.bf16.msra.mxu0 %v756
        %774 = vmatprep.subr.bf16.mxu0 0
        %775 = vmatpush2.bf16.msra.mxu0 0
        %776 = vmatprep.subr.bf16.mxu0 0
        %777 = vmatpush2.bf16.msra.mxu0 0
        %778 = vmatprep.subr.bf16.mxu0 0
        %779 = vmatpush2.bf16.msra.mxu0 0
        %780 = vmatprep.subr.bf16.mxu0 0
        %781 = vmatpush2.bf16.msra.mxu0 0
        %782 = vmatprep.subr.bf16.mxu0 0
        %783 = vmatpush2.bf16.msra.mxu0 0
        %784 = vmatprep.subr.bf16.mxu0 0
        %785 = vmatpush2.bf16.msra.mxu0 0
        %786 = vmatprep.subr.bf16.mxu0 0
        %787 = vmatpush2.bf16.msra.mxu0 0
        %788 = vmatprep.subr.bf16.mxu0 0
        %789 = vmatpush2.bf16.msra.mxu0 0
        %790 = vmatprep.mubr.bf16.mxu0 0
        %791 = vmatmul.mubr.bf16.gmra.mxu0 %v753
        %v792 = vpop.f32.mrf.mxu0
        %v793 = vadd.f32 0.0, %v792
        %v794 = vpop.f32.mrf.mxu0
        %v795 = vpop.f32.mrf.mxu0
        %v796 = vpop.f32.mrf.mxu0
        %797 = vdwg.mxu0
        %v798 = vrcp.pop %v748
        %v799 = vmul.f32 %v793, %v798
        %v800 = vpack.c.bf16 %v799, %v799
        %802 = vrot.lane.b32.xlu0 %v576, 8
        %v803 = vpop.permute.xlu0 %802
        %805 = vrot.lane.b32.xlu0 %v688, 16
        %v806 = vpop.permute.xlu0 %805
        %808 = vrot.lane.b32.xlu0 %v800, 24
        %v809 = vpop.permute.xlu0 %808
        %v812 = vsel %vm355, %v464, %v803
        %vm813 = vcmask 130048
        %v815 = vsel %vm813, %v812, %v806
        %vm816 = vcmask 195584
        %v818 = vsel %vm816, %v815, %v809
        %v819 = vld [vmem:[%s2] sm:$0xf]
        %v820 = vld [vmem:[%s2 + $0x4] sm:$0xf]
        %v821 = vld [vmem:[%s2 + $0x8] sm:$0xf]
        %v822 = vld [vmem:[%s2 + $0xc] sm:$0xf]
        %v823 = vlaneseq
        %v824 = vshrl.u32 %v823, 7
        %v825 = vsub.s32 0, %v824
        %v826 = vrot.slane %v251, %v825
        %v831 = vunpack.c.l.b16 %v819
        %v832 = vunpack.c.l.b16 %v820
        %v833 = vunpack.c.l.b16 %v821
        %v834 = vunpack.c.l.b16 %v822
        %v835 = vpack.c.b16 %v832, %v831
        %v836 = vpack.c.b16 %v834, %v833
        %v839 = vsel %vm257, %v818, 0
        %841 = vmatprep.subr.bf16.mxu0 0
        %842 = vmatpush1.bf16.msra.mxu0 0
        %843 = vmatprep.subr.bf16.mxu0 0
        %844 = vmatpush1.bf16.msra.mxu0 0
        %845 = vmatprep.subr.bf16.mxu0 0
        %846 = vmatpush1.bf16.msra.mxu0 0
        %847 = vmatprep.subr.bf16.mxu0 0
        %848 = vmatpush1.bf16.msra.mxu0 0
        %849 = vmatprep.subr.bf16.mxu0 0
        %850 = vmatpush1.bf16.msra.mxu0 0
        %851 = vmatprep.subr.bf16.mxu0 0
        %852 = vmatpush1.bf16.msra.mxu0 0
        %853 = vmatprep.subr.bf16.mxu0 0
        %854 = vmatpush1.bf16.msra.mxu0 %v836
        %855 = vmatprep.subr.bf16.mxu0 0
        %856 = vmatpush1.bf16.msra.mxu0 %v835
        %857 = vmatprep.subr.bf16.mxu0 0
        %858 = vmatpush2.bf16.msra.mxu0 0
        %859 = vmatprep.subr.bf16.mxu0 0
        %860 = vmatpush2.bf16.msra.mxu0 0
        %861 = vmatprep.subr.bf16.mxu0 0
        %862 = vmatpush2.bf16.msra.mxu0 0
        %863 = vmatprep.subr.bf16.mxu0 0
        %864 = vmatpush2.bf16.msra.mxu0 0
        %865 = vmatprep.subr.bf16.mxu0 0
        %866 = vmatpush2.bf16.msra.mxu0 0
        %867 = vmatprep.subr.bf16.mxu0 0
        %868 = vmatpush2.bf16.msra.mxu0 0
        %869 = vmatprep.subr.bf16.mxu0 0
        %870 = vmatpush2.bf16.msra.mxu0 0
        %871 = vmatprep.subr.bf16.mxu0 0
        %872 = vmatpush2.bf16.msra.mxu0 0
        %873 = vmatprep.mubr.bf16.mxu0 0
        %874 = vmatmul.mubr.bf16.gmra.mxu0 %v839
        %v875 = vpop.f32.mrf.mxu0
        %v876 = vadd.f32 %v826, %v875
        %v877 = vpop.f32.mrf.mxu0
        %v878 = vpop.f32.mrf.mxu0
        %v879 = vpop.f32.mrf.mxu0
        %880 = vdwg.mxu0
        %v881 = vadd.f32 %v876, %v248
        %v882 = vsel %vm257, %v881, 0.0
        %883 = vadd.xlane.f32.xlu0 %v882
        %v884 = vpop.xlane.xlu0 %883
        %v885 = vmul.f32 %v884, %v261
        %v886 = vsub.f32 %v881, %v885
        %v887 = vmul.f32 %v886, %v886
        %v888 = vsel %vm257, %v887, 0.0
        %889 = vadd.xlane.f32.xlu0 %v888
        %v890 = vpop.xlane.xlu0 %889
        %v891 = vmul.f32 %v890, %v261
        %v892 = vadd.f32 %v891, 1e-05
        %v893 = vrsqrt.pop %v892
        %v894 = vmul.f32 %v886, %v893
        %v895 = vlaneseq
        %v896 = vshrl.u32 %v895, 7
        %v897 = vsub.s32 0, %v896
        %v898 = vrot.slane %v252, %v897
        %v899 = vmul.f32 %v894, %v898
        %v900 = vlaneseq
        %v901 = vshrl.u32 %v900, 7
        %v902 = vsub.s32 0, %v901
        %v903 = vrot.slane %v253, %v902
        %v904 = vadd.f32 %v899, %v903
        %v905 = vpack.c.bf16 %v904, %v904
        %v906 = vld [vmem:[%s3] sm:$0xf]
        %v907 = vld [vmem:[%s3 + $0x4] sm:$0xf]
        %v908 = vld [vmem:[%s3 + $0x8] sm:$0xf]
        %v909 = vld [vmem:[%s3 + $0xc] sm:$0xf]
        %v910 = vlaneseq
        %v911 = vshrl.u32 %v910, 7
        %v912 = vsub.s32 0, %v911
        %v913 = vrot.slane %v255, %v912
        %v918 = vunpack.c.l.b16 %v906
        %v919 = vunpack.c.l.b16 %v907
        %v920 = vunpack.c.l.b16 %v908
        %v921 = vunpack.c.l.b16 %v909
        %v922 = vpack.c.b16 %v919, %v918
        %v923 = vpack.c.b16 %v921, %v920
        %v927 = vsel %vm257, %v905, 0
        %929 = vmatprep.subr.bf16.mxu0 0
        %930 = vmatpush1.bf16.msra.mxu0 0
        %931 = vmatprep.subr.bf16.mxu0 0
        %932 = vmatpush1.bf16.msra.mxu0 0
        %933 = vmatprep.subr.bf16.mxu0 0
        %934 = vmatpush1.bf16.msra.mxu0 0
        %935 = vmatprep.subr.bf16.mxu0 0
        %936 = vmatpush1.bf16.msra.mxu0 0
        %937 = vmatprep.subr.bf16.mxu0 0
        %938 = vmatpush1.bf16.msra.mxu0 0
        %939 = vmatprep.subr.bf16.mxu0 0
        %940 = vmatpush1.bf16.msra.mxu0 0
        %941 = vmatprep.subr.bf16.mxu0 0
        %942 = vmatpush1.bf16.msra.mxu0 %v923
        %943 = vmatprep.subr.bf16.mxu0 0
        %944 = vmatpush1.bf16.msra.mxu0 %v922
        %945 = vmatprep.subr.bf16.mxu0 0
        %946 = vmatpush2.bf16.msra.mxu0 0
        %947 = vmatprep.subr.bf16.mxu0 0
        %948 = vmatpush2.bf16.msra.mxu0 0
        %949 = vmatprep.subr.bf16.mxu0 0
        %950 = vmatpush2.bf16.msra.mxu0 0
        %951 = vmatprep.subr.bf16.mxu0 0
        %952 = vmatpush2.bf16.msra.mxu0 0
        %953 = vmatprep.subr.bf16.mxu0 0
        %954 = vmatpush2.bf16.msra.mxu0 0
        %955 = vmatprep.subr.bf16.mxu0 0
        %956 = vmatpush2.bf16.msra.mxu0 0
        %957 = vmatprep.subr.bf16.mxu0 0
        %958 = vmatpush2.bf16.msra.mxu0 0
        %959 = vmatprep.subr.bf16.mxu0 0
        %960 = vmatpush2.bf16.msra.mxu0 0
        %961 = vmatprep.mubr.bf16.mxu0 0
        %962 = vmatmul.mubr.bf16.gmra.mxu0 %v927
        %v963 = vpop.f32.mrf.mxu0
        %v964 = vadd.f32 %v913, %v963
        %v965 = vpop.f32.mrf.mxu0
        %v966 = vpop.f32.mrf.mxu0
        %v967 = vpop.f32.mrf.mxu0
        %968 = vdwg.mxu0
        %v969 = vmul.f32 %v964, 1.702
        %v970 = vxor.u32 %v969, 2147483648
        %v971 = vmul.f32 %v970, 1.442695
        %v972 = vpow.pop %v971
        %v973 = vadd.f32 %v972, 1.0
        %v974 = vrcp.pop %v973
        %v975 = vmul.f32 1.0, %v974
        %v976 = vmul.f32 %v964, %v975
        %v977 = vpack.c.bf16 %v976, %v976
        %v978 = vld [vmem:[%s4] sm:$0xf]
        %v979 = vld [vmem:[%s4 + $0x4] sm:$0xf]
        %v980 = vld [vmem:[%s4 + $0x8] sm:$0xf]
        %v981 = vld [vmem:[%s4 + $0xc] sm:$0xf]
        %v982 = vld [vmem:[%s4 + $0x10] sm:$0xf]
        %v983 = vld [vmem:[%s4 + $0x14] sm:$0xf]
        %v984 = vld [vmem:[%s4 + $0x18] sm:$0xf]
        %v985 = vld [vmem:[%s4 + $0x1c] sm:$0xf]
        %v986 = vld [vmem:[%s4 + $0x20] sm:$0xf]
        %v987 = vld [vmem:[%s4 + $0x24] sm:$0xf]
        %v988 = vld [vmem:[%s4 + $0x28] sm:$0xf]
        %v989 = vld [vmem:[%s4 + $0x2c] sm:$0xf]
        %v990 = vld [vmem:[%s4 + $0x30] sm:$0xf]
        %v991 = vld [vmem:[%s4 + $0x34] sm:$0xf]
        %v992 = vld [vmem:[%s4 + $0x38] sm:$0xf]
        %v993 = vld [vmem:[%s4 + $0x3c] sm:$0xf]
        %v994 = vlaneseq
        %v995 = vshrl.u32 %v994, 7
        %v996 = vsub.s32 0, %v995
        %v997 = vrot.slane %v254, %v996
        %v1014 = vunpack.c.l.b16 %v978
        %v1015 = vunpack.c.l.b16 %v979
        %v1016 = vunpack.c.l.b16 %v980
        %v1017 = vunpack.c.l.b16 %v981
        %v1018 = vunpack.c.l.b16 %v982
        %v1019 = vunpack.c.l.b16 %v983
        %v1020 = vunpack.c.l.b16 %v984
        %v1021 = vunpack.c.l.b16 %v985
        %v1022 = vunpack.c.l.b16 %v986
        %v1023 = vunpack.c.l.b16 %v987
        %v1024 = vunpack.c.l.b16 %v988
        %v1025 = vunpack.c.l.b16 %v989
        %v1026 = vunpack.c.l.b16 %v990
        %v1027 = vunpack.c.l.b16 %v991
        %v1028 = vunpack.c.l.b16 %v992
        %v1029 = vunpack.c.l.b16 %v993
        %v1030 = vpack.c.b16 %v1015, %v1014
        %v1031 = vpack.c.b16 %v1017, %v1016
        %v1032 = vpack.c.b16 %v1019, %v1018
        %v1033 = vpack.c.b16 %v1021, %v1020
        %v1034 = vpack.c.b16 %v1023, %v1022
        %v1035 = vpack.c.b16 %v1025, %v1024
        %v1036 = vpack.c.b16 %v1027, %v1026
        %v1037 = vpack.c.b16 %v1029, %v1028
        %1046 = vmatprep.subr.bf16.mxu0 0
        %1047 = vmatpush1.bf16.msra.mxu0 %v1037
        %1048 = vmatprep.subr.bf16.mxu0 0
        %1049 = vmatpush1.bf16.msra.mxu0 %v1036
        %1050 = vmatprep.subr.bf16.mxu0 0
        %1051 = vmatpush1.bf16.msra.mxu0 %v1035
        %1052 = vmatprep.subr.bf16.mxu0 0
        %1053 = vmatpush1.bf16.msra.mxu0 %v1034
        %1054 = vmatprep.subr.bf16.mxu0 0
        %1055 = vmatpush1.bf16.msra.mxu0 %v1033
        %1056 = vmatprep.subr.bf16.mxu0 0
        %1057 = vmatpush1.bf16.msra.mxu0 %v1032
        %1058 = vmatprep.subr.bf16.mxu0 0
        %1059 = vmatpush1.bf16.msra.mxu0 %v1031
        %1060 = vmatprep.subr.bf16.mxu0 0
        %1061 = vmatpush1.bf16.msra.mxu0 %v1030
        %1062 = vmatprep.subr.bf16.mxu0 0
        %1063 = vmatpush2.bf16.msra.mxu0 0
        %1064 = vmatprep.subr.bf16.mxu0 0
        %1065 = vmatpush2.bf16.msra.mxu0 0
        %1066 = vmatprep.subr.bf16.mxu0 0
        %1067 = vmatpush2.bf16.msra.mxu0 0
        %1068 = vmatprep.subr.bf16.mxu0 0
        %1069 = vmatpush2.bf16.msra.mxu0 0
        %1070 = vmatprep.subr.bf16.mxu0 0
        %1071 = vmatpush2.bf16.msra.mxu0 0
        %1072 = vmatprep.subr.bf16.mxu0 0
        %1073 = vmatpush2.bf16.msra.mxu0 0
        %1074 = vmatprep.subr.bf16.mxu0 0
        %1075 = vmatpush2.bf16.msra.mxu0 0
        %1076 = vmatprep.subr.bf16.mxu0 0
        %1077 = vmatpush2.bf16.msra.mxu0 0
        %1078 = vmatprep.mubr.bf16.mxu0 0
        %1079 = vmatmul.mubr.bf16.gmra.mxu0 %v977
        %v1080 = vpop.f32.mrf.mxu0
        %v1081 = vadd.f32 %v997, %v1080
        %v1082 = vpop.f32.mrf.mxu0
        %v1083 = vpop.f32.mrf.mxu0
        %v1084 = vpop.f32.mrf.mxu0
        %1085 = vdwg.mxu0
        %v1086 = vadd.f32 %v1081, %v881
        %1087 = vst.msk [vmem:[%s242] sm:$0xff] %vm257, %v1086
        %s1088 = sand.u32 %s159, 1
        %s1089 = scalar_lea.sflag [#allocation3], %s1088
        %s1090 = sand.u32 %s159, 1
        %s1091 = smul.addr %s1090, 8
        %s1092 = scalar_lea.vmem [#allocation2], %s1091
        // Predicated region
        $region45: #{tpu_custom_call.1} parent=43 // pred_check
          %p1093 = pneg %p169
        $region46: #{tpu_custom_call.1} parent=43 // pred_check_branch
          %1095 = sbr.rel (%p1093) target = $region48
        $region47: #{tpu_custom_call.1} parent=43 // pred_region
          %s1097 = ssub.s32 128, 128
          %1098 = vsyncadd %s1089, %s1097
          %s1099 = smul.addr %s20, 128
          %s1100 = scalar_lea.hbm %s6, %s1099
          %s1102 = sshll.u32 %s1092, 4
          %s1103 = int_to_ptr.vmem [resolvable:$true] %s1102
          %1105 = dma.vmem_to_hbm [thread:$0]  %s1103, 128, %s1100, %s1089
        $region48: #{tpu_custom_call.1} parent=43 // pred_fallthru
          _
      $region44: #{tpu_custom_call.1} parent=5 // pred_fallthru
        _
      %p1106 = scmp.le.s32.totalorder 2, %s15
      // Predicated region
      $region49: #{tpu_custom_call.1} parent=5 // pred_check
        %p1107 = pneg %p1106
      $region50: #{tpu_custom_call.1} parent=5 // pred_check_branch
        %1109 = sbr.rel (%p1107) target = $region52
      $region51: #{tpu_custom_call.1} parent=5 // pred_region
        %s1110 = ssub.s32 %s15, 2
        // Predicated region
        $region53: #{tpu_custom_call.1} parent=51 // pred_check
          %p1111 = pneg %p175
        $region54: #{tpu_custom_call.1} parent=51 // pred_check_branch
          %1113 = sbr.rel (%p1111) target = $region56
        $region55: #{tpu_custom_call.1} parent=51 // pred_region
          %s1114 = sand.u32 %s160, 1
          %s1115 = scalar_lea.sflag [#allocation3], %s1114
          %s1116 = sand.u32 %s160, 1
          %s1117 = smul.addr %s1116, 8
          %s1118 = scalar_lea.vmem [#allocation2], %s1117
          %1119 = dma.done %s1115, 128
        $region56: #{tpu_custom_call.1} parent=51 // pred_fallthru
          _
      $region52: #{tpu_custom_call.1} parent=5 // pred_fallthru
        _
    $region6: #{tpu_custom_call.1} parent=1 // loop_footer
      %s19 = sadd.s32 1, %s15
    $region7: #{tpu_custom_call.1} parent=1 // loop_footer_branch
      %14 = sbr.rel target = $region3
    $region8: #{tpu_custom_call.1} parent=1 // loop_exit
      _
    %1120 = vsyncpa [#allocation3], 1
    %s1121 = scalar_lea.sflag [#allocation3], 1
    %1122 = vsyncpa %s1121, 1

// kernel: tpu_custom_call.1
$region0: #{tpu_custom_call.1}
  #allocation0 [shape = 'u32[]', space=smem, size = 0x4, offset = 0x4, fixed_abs, tag = 'smem constant byte address 0x4 - core index']
  #allocation1 [shape = 'u32[144,128]{1,0:T(1,128)}', space=vmem, size = 0x12000, scoped, tag = 'internal scratch']
  %s0 = inlined_call_operand.vmem [shape: f32[2,8,32], index: 0, kind: input, shape index: {}]
  %s1 = inlined_call_operand.vmem [shape: bf16[32,96], index: 1, kind: input, shape index: {}]
  %s2 = inlined_call_operand.vmem [shape: bf16[32,32], index: 2, kind: input, shape index: {}]
  %s3 = inlined_call_operand.vmem [shape: bf16[32,128], index: 3, kind: input, shape index: {}]
  %s4 = inlined_call_operand.vmem [shape: bf16[128,32], index: 4, kind: input, shape index: {}]
  %s5 = inlined_call_operand.vmem [shape: f32[8,128], index: 5, kind: input, shape index: {}]
  %s6 = inlined_call_operand.hbm [shape: f32[2,8,32], index: 6, kind: output, shape index: {}]
  %s7 = sld [smem:[#allocation0]]
  $region57: #{tpu_custom_call.1} parent=0
    _
  %s9 = ssub.s32 1, %s7
  %s10 = scalar_select 0, %s9, %s7
  $region1: #{tpu_custom_call.1} parent=0
    #allocation2 [shape = 'u8[8192]{0}', space=vmem, size = 0x2000, scoped, tag = 'output window, operand 0']
    #allocation3 [shape = 's32[2]{0}', space=sflag, size = 0x8, scoped, tag = 'scoped memory for tpu_custom_call.1']
    %11 = vsyncpa [#allocation3], 0
    %s12 = scalar_lea.sflag [#allocation3], 1
    %13 = vsyncpa %s12, 0
    loop: start=0, step=1, limit=4
    $region2: #{tpu_custom_call.1} parent=1 // loop_pre_header
      _
    $region3: #{tpu_custom_call.1} parent=1 // loop_header
      %s15 = sphi 0, %s19
      %p16 = scmp.ge.s32.totalorder %s15, 4
      %s25 = sphi 0, %s27
      %s28 = sphi 0, %s25
      %s29 = sphi 0, %s28
      %s45 = sphi 0, %s29
      %s49 = sphi 0, %s49
      %s51 = sphi 0, %s49
      %s52 = sphi 0, %s51
      %s66 = sphi 0, %s52
      %s70 = sphi 0, %s70
      %s72 = sphi 0, %s70
      %s73 = sphi 0, %s72
      %s87 = sphi 0, %s73
      %s91 = sphi 0, %s91
      %s93 = sphi 0, %s91
      %s94 = sphi 0, %s93
      %s108 = sphi 0, %s94
      %s112 = sphi 0, %s112
      %s114 = sphi 0, %s112
      %s115 = sphi 0, %s114
      %s129 = sphi 0, %s115
      %s133 = sphi 0, %s133
      %s135 = sphi 0, %s133
      %s136 = sphi 0, %s135
      %s150 = sphi 0, %s136
      %s156 = sphi 0, %s158
      %s159 = sphi 0, %s156
      %s160 = sphi 0, %s159
      %s176 = sphi 0, %s160
    $region4: #{tpu_custom_call.1} parent=1 // loop_header_branch
      %18 = sbr.rel (%p16) target = $region8
    $region5: #{tpu_custom_call.1} parent=1 // loop_body
      %s20 = ssub.s32 %s15, 1
      %s21 = ssub.s32 %s15, 2
      %s22 = sadd.s32 %s15, 1
      %s23 = ssub.s32 %s15, %s22
      %p24 = scmp.eq.s32.totalorder %s23, 0
      %s26 = sadd.s32 %s25, 1
      %s27 = scalar_select %p24, %s25, %s26
      %p30 = pneg %p24
      %p31 = scmp.eq.s32.totalorder %s15, 1
      %p32 = por %p30, %p31
      %p33 = scmp.ne.s32.totalorder %s25, %s28
      %p34 = scmp.eq.s32.totalorder %s15, 0
      %p35 = por %p33, %p34
      %p36 = scmp.ne.s32.totalorder %s25, %s28
      %p37 = scmp.eq.s32.totalorder %s20, 1
      %p38 = por %p36, %p37
      %p39 = scmp.ne.s32.totalorder %s28, %s29
      %p40 = scmp.eq.s32.totalorder %s20, 0
      %p41 = por %p39, %p40
      %p42 = scmp.ne.s32.totalorder %s28, %s29
      %p43 = scmp.eq.s32.totalorder %s21, 1
      %p44 = por %p42, %p43
      %p46 = scmp.ne.s32.totalorder %s29, %s45
      %p47 = scmp.eq.s32.totalorder %s21, 0
      %p48 = por %p46, %p47
      %s50 = sadd.s32 %s49, 1
      %p53 = scmp.eq.s32.totalorder %s15, 1
      %p54 = scmp.ne.s32.totalorder %s49, %s51
      %p55 = scmp.eq.s32.totalorder %s15, 0
      %p56 = por %p54, %p55
      %p57 = scmp.ne.s32.totalorder %s49, %s51
      %p58 = scmp.eq.s32.totalorder %s20, 1
      %p59 = por %p57, %p58
      %p60 = scmp.ne.s32.totalorder %s51, %s52
      %p61 = scmp.eq.s32.totalorder %s20, 0
      %p62 = por %p60, %p61
      %p63 = scmp.ne.s32.totalorder %s51, %s52
      %p64 = scmp.eq.s32.totalorder %s21, 1
      %p65 = por %p63, %p64
      %p67 = scmp.ne.s32.totalorder %s52, %s66
      %p68 = scmp.eq.s32.totalorder %s21, 0
      %p69 = por %p67, %p68
      %s71 = sadd.s32 %s70, 1
      %p74 = scmp.eq.s32.totalorder %s15, 1
      %p75 = scmp.ne.s32.totalorder %s70, %s72
      %p76 = scmp.eq.s32.totalorder %s15, 0
      %p77 = por %p75, %p76
      %p78 = scmp.ne.s32.totalorder %s70, %s72
      %p79 = scmp.eq.s32.totalorder %s20, 1
      %p80 = por %p78, %p79
      %p81 = scmp.ne.s32.totalorder %s72, %s73
      %p82 = scmp.eq.s32.totalorder %s20, 0
      %p83 = por %p81, %p82
      %p84 = scmp.ne.s32.totalorder %s72, %s73
      %p85 = scmp.eq.s32.totalorder %s21, 1
      %p86 = por %p84, %p85
      %p88 = scmp.ne.s32.totalorder %s73, %s87
      %p89 = scmp.eq.s32.totalorder %s21, 0
      %p90 = por %p88, %p89
      %s92 = sadd.s32 %s91, 1
      %p95 = scmp.eq.s32.totalorder %s15, 1
      %p96 = scmp.ne.s32.totalorder %s91, %s93
      %p97 = scmp.eq.s32.totalorder %s15, 0
      %p98 = por %p96, %p97
      %p99 = scmp.ne.s32.totalorder %s91, %s93
      %p100 = scmp.eq.s32.totalorder %s20, 1
      %p101 = por %p99, %p100
      %p102 = scmp.ne.s32.totalorder %s93, %s94
      %p103 = scmp.eq.s32.totalorder %s20, 0
      %p104 = por %p102, %p103
      %p105 = scmp.ne.s32.totalorder %s93, %s94
      %p106 = scmp.eq.s32.totalorder %s21, 1
      %p107 = por %p105, %p106
      %p109 = scmp.ne.s32.totalorder %s94, %s108
      %p110 = scmp.eq.s32.totalorder %s21, 0
      %p111 = por %p109, %p110
      %s113 = sadd.s32 %s112, 1
      %p116 = scmp.eq.s32.totalorder %s15, 1
      %p117 = scmp.ne.s32.totalorder %s112, %s114
      %p118 = scmp.eq.s32.totalorder %s15, 0
      %p119 = por %p117, %p118
      %p120 = scmp.ne.s32.totalorder %s112, %s114
      %p121 = scmp.eq.s32.totalorder %s20, 1
      %p122 = por %p120, %p121
      %p123 = scmp.ne.s32.totalorder %s114, %s115
      %p124 = scmp.eq.s32.totalorder %s20, 0
      %p125 = por %p123, %p124
      %p126 = scmp.ne.s32.totalorder %s114, %s115
      %p127 = scmp.eq.s32.totalorder %s21, 1
      %p128 = por %p126, %p127
      %p130 = scmp.ne.s32.totalorder %s115, %s129
      %p131 = scmp.eq.s32.totalorder %s21, 0
      %p132 = por %p130, %p131
      %s134 = sadd.s32 %s133, 1
      %p137 = scmp.eq.s32.totalorder %s15, 1
      %p138 = scmp.ne.s32.totalorder %s133, %s135
      %p139 = scmp.eq.s32.totalorder %s15, 0
      %p140 = por %p138, %p139
      %p141 = scmp.ne.s32.totalorder %s133, %s135
      %p142 = scmp.eq.s32.totalorder %s20, 1
      %p143 = por %p141, %p142
      %p144 = scmp.ne.s32.totalorder %s135, %s136
      %p145 = scmp.eq.s32.totalorder %s20, 0
      %p146 = por %p144, %p145
      %p147 = scmp.ne.s32.totalorder %s135, %s136
      %p148 = scmp.eq.s32.totalorder %s21, 1
      %p149 = por %p147, %p148
      %p151 = scmp.ne.s32.totalorder %s136, %s150
      %p152 = scmp.eq.s32.totalorder %s21, 0
      %p153 = por %p151, %p152
      %s154 = ssub.s32 %s15, %s22
      %p155 = scmp.eq.s32.totalorder %s154, 0
      %s157 = sadd.s32 %s156, 1
      %s158 = scalar_select %p155, %s156, %s157
      %p161 = pneg %p155
      %p162 = scmp.eq.s32.totalorder %s15, 1
      %p163 = por %p161, %p162
      %p164 = scmp.ne.s32.totalorder %s156, %s159
      %p165 = scmp.eq.s32.totalorder %s15, 0
      %p166 = por %p164, %p165
      %p167 = scmp.ne.s32.totalorder %s156, %s159
      %p168 = scmp.eq.s32.totalorder %s20, 1
      %p169 = por %p167, %p168
      %p170 = scmp.ne.s32.totalorder %s159, %s160
      %p171 = scmp.eq.s32.totalorder %s20, 0
      %p172 = por %p170, %p171
      %p173 = scmp.ne.s32.totalorder %s159, %s160
      %p174 = scmp.eq.s32.totalorder %s21, 1
      %p175 = por %p173, %p174
      %p177 = scmp.ne.s32.totalorder %s160, %s176
      %p178 = scmp.eq.s32.totalorder %s21, 0
      %p179 = por %p177, %p178
      %p180 = scmp.le.s32.totalorder 1, %s15
      %p181 = scmp.lt.s32.totalorder %s15, 3
      %p182 = pnand %p180, %p181
      %p183 = pneg %p182
      // Predicated region
      $region9: #{tpu_custom_call.1} parent=5 // pred_check
        _
      $region10: #{tpu_custom_call.1} parent=5 // pred_check_branch
        %185 = sbr.rel (%p182) target = $region12
      $region11: #{tpu_custom_call.1} parent=5 // pred_region
        %s186 = ssub.s32 %s15, 1
        // Predicated region
        $region13: #{tpu_custom_call.1} parent=11 // pred_check
          %p187 = pneg %p62
        $region14: #{tpu_custom_call.1} parent=11 // pred_check_branch
          %189 = sbr.rel (%p187) target = $region16
        $region15: #{tpu_custom_call.1} parent=11 // pred_region
          _
        $region16: #{tpu_custom_call.1} parent=11 // pred_fallthru
          _
        // Predicated region
        $region17: #{tpu_custom_call.1} parent=11 // pred_check
          %p190 = pneg %p83
        $region18: #{tpu_custom_call.1} parent=11 // pred_check_branch
          %192 = sbr.rel (%p190) target = $region20
        $region19: #{tpu_custom_call.1} parent=11 // pred_region
          _
        $region20: #{tpu_custom_call.1} parent=11 // pred_fallthru
          _
        // Predicated region
        $region21: #{tpu_custom_call.1} parent=11 // pred_check
          %p193 = pneg %p104
        $region22: #{tpu_custom_call.1} parent=11 // pred_check_branch
          %195 = sbr.rel (%p193) target = $region24
        $region23: #{tpu_custom_call.1} parent=11 // pred_region
          _
        $region24: #{tpu_custom_call.1} parent=11 // pred_fallthru
          _
        // Predicated region
        $region25: #{tpu_custom_call.1} parent=11 // pred_check
          %p196 = pneg %p125
        $region26: #{tpu_custom_call.1} parent=11 // pred_check_branch
          %198 = sbr.rel (%p196) target = $region28
        $region27: #{tpu_custom_call.1} parent=11 // pred_region
          _
        $region28: #{tpu_custom_call.1} parent=11 // pred_fallthru
          _
        // Predicated region
        $region29: #{tpu_custom_call.1} parent=11 // pred_check
          %p199 = pneg %p146
        $region30: #{tpu_custom_call.1} parent=11 // pred_check_branch
          %201 = sbr.rel (%p199) target = $region32
        $region31: #{tpu_custom_call.1} parent=11 // pred_region
          _
        $region32: #{tpu_custom_call.1} parent=11 // pred_fallthru
          _
      $region12: #{tpu_custom_call.1} parent=5 // pred_fallthru
        _
      %p202 = scmp.lt.s32.totalorder %s15, 2
      // Predicated region
      $region33: #{tpu_custom_call.1} parent=5 // pred_check
        %p203 = pneg %p202
      $region34: #{tpu_custom_call.1} parent=5 // pred_check_branch
        %205 = sbr.rel (%p203) target = $region36
      $region35: #{tpu_custom_call.1} parent=5 // pred_region
        // Predicated region
        $region37: #{tpu_custom_call.1} parent=35 // pred_check
          %p206 = pneg %p35
        $region38: #{tpu_custom_call.1} parent=35 // pred_check_branch
          %208 = sbr.rel (%p206) target = $region40
        $region39: #{tpu_custom_call.1} parent=35 // pred_region
          %p209 = scmp.lt.s32.totalorder %s15, 1
          %s210 = scalar_select %p209, %s15, 1
          %s211 = smul.addr %s210, 8
          %s212 = scalar_lea.vmem %s0, %s211
        $region40: #{tpu_custom_call.1} parent=35 // pred_fallthru
          _
      $region36: #{tpu_custom_call.1} parent=5 // pred_fallthru
        _
      %p213 = scmp.le.s32.totalorder 1, %s15
      %p214 = scmp.lt.s32.totalorder %s15, 3
      %p215 = pnand %p213, %p214
      %p216 = pneg %p215
      // Predicated region
      $region41: #{tpu_custom_call.1} parent=5 // pred_check
        _
      $region42: #{tpu_custom_call.1} parent=5 // pred_check_branch
        %218 = sbr.rel (%p215) target = $region44
      $region43: #{tpu_custom_call.1} parent=5 // pred_region
        %s219 = ssub.s32 %s15, 1
        %p220 = scmp.lt.s32.totalorder %s20, 1
        %s221 = scalar_select %p220, %s20, 1
        %s222 = smul.addr %s221, 8
        %s223 = scalar_lea.vmem %s0, %s222
        %p224 = pneg %p41
        %p225 = pneg %p38
        %p226 = pneg %p62
        %p227 = pneg %p59
        %p228 = pneg %p83
        %p229 = pneg %p80
        %p230 = pneg %p104
        %p231 = pneg %p101
        %p232 = pneg %p125
        %p233 = pneg %p122
        %p234 = pneg %p146
        %p235 = pneg %p143
        %p236 = pneg %p172
        %p237 = pneg %p169
        %s238 = sand.u32 %s159, 1
        %s239 = scalar_lea.sflag [#allocation3], %s238
        %s240 = sand.u32 %s159, 1
        %s241 = smul.addr %s240, 8
        %s242 = scalar_lea.vmem [#allocation2], %s241
        %p243 = scmp.lt.s32.totalorder %s20, 1
        %s244 = scalar_select %p243, %s20, 1
        %s245 = smul.addr %s244, 8
        %s246 = scalar_lea.vmem %s0, %s245
        %v248 = vld [vmem:[%s246] sm:$0xff]
        %v249 = vld [vmem:[%s5] sm:$0x1]
        %v250 = vld [vmem:[%s5 + $0x1] sm:$0x1]
        %v251 = vld [vmem:[%s5 + $0x2] sm:$0x1]
        %v252 = vld [vmem:[%s5 + $0x3] sm:$0x1]
        %v253 = vld [vmem:[%s5 + $0x4] sm:$0x1]
        %v254 = vld [vmem:[%s5 + $0x5] sm:$0x1]
        %v255 = vld [vmem:[%s5 + $0x6] sm:$0x1]
        %v256 = vld [vmem:[%s5 + $0x7] sm:$0x1]
        %vm257 = vcmask 261120
        %v258 = vsel %vm257, %v248, 0.0
        %259 = vadd.xlane.f32.xlu0 %v258
        %v260 = vpop.xlane.xlu0 %259
        %v261 = vrcp.pop 32.0
        %v262 = vmul.f32 %v260, %v261
        %v263 = vsub.f32 %v248, %v262
        %v264 = vmul.f32 %v263, %v263
        %v265 = vsel %vm257, %v264, 0.0
        %266 = vadd.xlane.f32.xlu0 %v265
        %v267 = vpop.xlane.xlu0 %266
        %v268 = vmul.f32 %v267, %v261
        %v269 = vadd.f32 %v268, 1e-05
        %v270 = vrsqrt.pop %v269
        %v271 = vmul.f32 %v263, %v270
        %v272 = vlaneseq
        %v273 = vshrl.u32 %v272, 7
        %v274 = vsub.s32 0, %v273
        %v275 = vrot.slane %v249, %v274
        %v276 = vmul.f32 %v271, %v275
        %v277 = vlaneseq
        %v278 = vshrl.u32 %v277, 7
        %v279 = vsub.s32 0, %v278
        %v280 = vrot.slane %v250, %v279
        %v281 = vadd.f32 %v276, %v280
        %v282 = vpack.c.bf16 %v281, %v281
        %v283 = vld [vmem:[%s1] sm:$0xf]
        %v284 = vld [vmem:[%s1 + $0x4] sm:$0xf]
        %v285 = vld [vmem:[%s1 + $0x8] sm:$0xf]
        %v286 = vld [vmem:[%s1 + $0xc] sm:$0xf]
        %v287 = vlaneseq
        %v288 = vshrl.u32 %v287, 7
        %v289 = vsub.s32 0, %v288
        %v290 = vrot.slane %v256, %v289
        %v295 = vunpack.c.l.b16 %v283
        %v296 = vunpack.c.l.b16 %v284
        %v297 = vunpack.c.l.b16 %v285
        %v298 = vunpack.c.l.b16 %v286
        %v299 = vpack.c.b16 %v296, %v295
        %v300 = vpack.c.b16 %v298, %v297
        %v304 = vsel %vm257, %v282, 0
        %306 = vmatprep.subr.bf16.mxu0 0
        %307 = vmatpush1.bf16.msra.mxu0 0
        %308 = vmatprep.subr.bf16.mxu0 0
        %309 = vmatpush1.bf16.msra.mxu0 0
        %310 = vmatprep.subr.bf16.mxu0 0
        %311 = vmatpush1.bf16.msra.mxu0 0
        %312 = vmatprep.subr.bf16.mxu0 0
        %313 = vmatpush1.bf16.msra.mxu0 0
        %314 = vmatprep.subr.bf16.mxu0 0
        %315 = vmatpush1.bf16.msra.mxu0 0
        %316 = vmatprep.subr.bf16.mxu0 0
        %317 = vmatpush1.bf16.msra.mxu0 0
        %318 = vmatprep.subr.bf16.mxu0 0
        %319 = vmatpush1.bf16.msra.mxu0 %v300
        %320 = vmatprep.subr.bf16.mxu0 0
        %321 = vmatpush1.bf16.msra.mxu0 %v299
        %322 = vmatprep.subr.bf16.mxu0 0
        %323 = vmatpush2.bf16.msra.mxu0 0
        %324 = vmatprep.subr.bf16.mxu0 0
        %325 = vmatpush2.bf16.msra.mxu0 0
        %326 = vmatprep.subr.bf16.mxu0 0
        %327 = vmatpush2.bf16.msra.mxu0 0
        %328 = vmatprep.subr.bf16.mxu0 0
        %329 = vmatpush2.bf16.msra.mxu0 0
        %330 = vmatprep.subr.bf16.mxu0 0
        %331 = vmatpush2.bf16.msra.mxu0 0
        %332 = vmatprep.subr.bf16.mxu0 0
        %333 = vmatpush2.bf16.msra.mxu0 0
        %334 = vmatprep.subr.bf16.mxu0 0
        %335 = vmatpush2.bf16.msra.mxu0 0
        %336 = vmatprep.subr.bf16.mxu0 0
        %337 = vmatpush2.bf16.msra.mxu0 0
        %338 = vmatprep.mubr.bf16.mxu0 0
        %339 = vmatmul.mubr.bf16.gmra.mxu0 %v304
        %v340 = vpop.f32.mrf.mxu0
        %v341 = vadd.f32 %v290, %v340
        %v342 = vpop.f32.mrf.mxu0
        %v343 = vpop.f32.mrf.mxu0
        %v344 = vpop.f32.mrf.mxu0
        %345 = vdwg.mxu0
        %v346 = vpack.c.bf16 %v341, %v341
        %v347 = vlaneseq
        %v348 = vshrl.u32 %v347, 7
        %v349 = vlaneseq
        %v350 = vand.u32 %v349, 127
        %vm351 = vcmp.le.s32.totalorder %v350, %v348
        %353 = vrot.lane.b32.xlu0 %v346, 96
        %v354 = vpop.permute.xlu0 %353
        %vm355 = vcmask 64512
        %v357 = vsel %vm355, %v346, 0
        %v360 = vsel %vm355, %v354, 0
        %362 = vmatprep.subr.bf16.mxu0 0
        %363 = vmatpush1.bf16.xpose.msra.mxu0 0
        %364 = vmatprep.subr.bf16.mxu0 0
        %365 = vmatpush1.bf16.xpose.msra.mxu0 0
        %366 = vmatprep.subr.bf16.mxu0 0
        %367 = vmatpush1.bf16.xpose.msra.mxu0 0
        %368 = vmatprep.subr.bf16.mxu0 0
        %369 = vmatpush1.bf16.xpose.msra.mxu0 0
        %370 = vmatprep.subr.bf16.mxu0 0
        %371 = vmatpush1.bf16.xpose.msra.mxu0 0
        %372 = vmatprep.subr.bf16.mxu0 0
        %373 = vmatpush1.bf16.xpose.msra.mxu0 0
        %374 = vmatprep.subr.bf16.mxu0 0
        %375 = vmatpush1.bf16.xpose.msra.mxu0 0
        %376 = vmatprep.subr.bf16.mxu0 0
        %377 = vmatpush1.bf16.xpose.msra.mxu0 %v360
        %378 = vmatprep.subr.bf16.mxu0 0
        %379 = vmatpush2.bf16.xpose.msra.mxu0 0
        %380 = vmatprep.subr.bf16.mxu0 0
        %381 = vmatpush2.bf16.xpose.msra.mxu0 0
        %382 = vmatprep.subr.bf16.mxu0 0
        %383 = vmatpush2.bf16.xpose.msra.mxu0 0
        %384 = vmatprep.subr.bf16.mxu0 0
        %385 = vmatpush2.bf16.xpose.msra.mxu0 0
        %386 = vmatprep.subr.bf16.mxu0 0
        %387 = vmatpush2.bf16.xpose.msra.mxu0 0
        %388 = vmatprep.subr.bf16.mxu0 0
        %389 = vmatpush2.bf16.xpose.msra.mxu0 0
        %390 = vmatprep.subr.bf16.mxu0 0
        %391 = vmatpush2.bf16.xpose.msra.mxu0 0
        %392 = vmatprep.subr.bf16.mxu0 0
        %393 = vmatpush2.bf16.xpose.msra.mxu0 0
        %394 = vmatprep.mubr.bf16.mxu0 0
        %395 = vmatmul.mubr.bf16.gmra.mxu0 %v357
        %v396 = vpop.f32.mrf.mxu0
        %v397 = vadd.f32 0.0, %v396
        %v398 = vpop.f32.mrf.mxu0
        %v399 = vpop.f32.mrf.mxu0
        %v400 = vpop.f32.mrf.mxu0
        %401 = vdwg.mxu0
        %v402 = vsel %vm351, %v397, -1e+30
        %v403 = vsel %vm355, %v402, -inf
        %404 = vmax.xlane.f32.xlu0 %v403
        %v405 = vpop.xlane.xlu0 %404
        %v406 = vsub.f32 %v402, %v405
        %v407 = vmul.f32 %v406, 1.442695
        %v408 = vpow.pop %v407
        %v409 = vsel %vm355, %v408, 0.0
        %410 = vadd.xlane.f32.xlu0 %v409
        %v411 = vpop.xlane.xlu0 %410
        %v412 = vpack.c.bf16 %v408, %v408
        %413 = vrot.lane.b32.xlu0 %v346, 64
        %v414 = vpop.permute.xlu0 %413
        %v416 = vsel %vm355, %v412, 0
        %vm418 = vcmask 1043456
        %v420 = vsel %vm418, %v414, 0
        %422 = vmatprep.subr.bf16.mxu0 0
        %423 = vmatpush1.bf16.msra.mxu0 0
        %424 = vmatprep.subr.bf16.mxu0 0
        %425 = vmatpush1.bf16.msra.mxu0 0
        %426 = vmatprep.subr.bf16.mxu0 0
        %427 = vmatpush1.bf16.msra.mxu0 0
        %428 = vmatprep.subr.bf16.mxu0 0
        %429 = vmatpush1.bf16.msra.mxu0 0
        %430 = vmatprep.subr.bf16.mxu0 0
        %431 = vmatpush1.bf16.msra.mxu0 0
        %432 = vmatprep.subr.bf16.mxu0 0
        %433 = vmatpush1.bf16.msra.mxu0 0
        %434 = vmatprep.subr.bf16.mxu0 0
        %435 = vmatpush1.bf16.msra.mxu0 0
        %436 = vmatprep.subr.bf16.mxu0 0
        %437 = vmatpush1.bf16.msra.mxu0 %v420
        %438 = vmatprep.subr.bf16.mxu0 0
        %439 = vmatpush2.bf16.msra.mxu0 0
        %440 = vmatprep.subr.bf16.mxu0 0
        %441 = vmatpush2.bf16.msra.mxu0 0
        %442 = vmatprep.subr.bf16.mxu0 0
        %443 = vmatpush2.bf16.msra.mxu0 0
        %444 = vmatprep.subr.bf16.mxu0 0
        %445 = vmatpush2.bf16.msra.mxu0 0
        %446 = vmatprep.subr.bf16.mxu0 0
        %447 = vmatpush2.bf16.msra.mxu0 0
        %448 = vmatprep.subr.bf16.mxu0 0
        %449 = vmatpush2.bf16.msra.mxu0 0
        %450 = vmatprep.subr.bf16.mxu0 0
        %451 = vmatpush2.bf16.msra.mxu0 0
        %452 = vmatprep.subr.bf16.mxu0 0
        %453 = vmatpush2.bf16.msra.mxu0 0
        %454 = vmatprep.mubr.bf16.mxu0 0
        %455 = vmatmul.mubr.bf16.gmra.mxu0 %v416
        %v456 = vpop.f32.mrf.mxu0
        %v457 = vadd.f32 0.0, %v456
        %v458 = vpop.f32.mrf.mxu0
        %v459 = vpop.f32.mrf.mxu0
        %v460 = vpop.f32.mrf.mxu0
        %461 = vdwg.mxu0
        %v462 = vrcp.pop %v411
        %v463 = vmul.f32 %v457, %v462
        %v464 = vpack.c.bf16 %v463, %v463
        %465 = vrot.lane.b32.xlu0 %v346, 120
        %v466 = vpop.permute.xlu0 %465
        %467 = vrot.lane.b32.xlu0 %v346, 88
        %v468 = vpop.permute.xlu0 %467
        %v470 = vsel %vm355, %v466, 0
        %v473 = vsel %vm355, %v468, 0
        %475 = vmatprep.subr.bf16.mxu0 0
        %476 = vmatpush1.bf16.xpose.msra.mxu0 0
        %477 = vmatprep.subr.bf16.mxu0 0
        %478 = vmatpush1.bf16.xpose.msra.mxu0 0
        %479 = vmatprep.subr.bf16.mxu0 0
        %480 = vmatpush1.bf16.xpose.msra.mxu0 0
        %481 = vmatprep.subr.bf16.mxu0 0
        %482 = vmatpush1.bf16.xpose.msra.mxu0 0
        %483 = vmatprep.subr.bf16.mxu0 0
        %484 = vmatpush1.bf16.xpose.msra.mxu0 0
        %485 = vmatprep.subr.bf16.mxu0 0
        %486 = vmatpush1.bf16.xpose.msra.mxu0 0
        %487 = vmatprep.subr.bf16.mxu0 0
        %488 = vmatpush1.bf16.xpose.msra.mxu0 0
        %489 = vmatprep.subr.bf16.mxu0 0
        %490 = vmatpush1.bf16.xpose.msra.mxu0 %v473
        %491 = vmatprep.subr.bf16.mxu0 0
        %492 = vmatpush2.bf16.xpose.msra.mxu0 0
        %493 = vmatprep.subr.bf16.mxu0 0
        %494 = vmatpush2.bf16.xpose.msra.mxu0 0
        %495 = vmatprep.subr.bf16.mxu0 0
        %496 = vmatpush2.bf16.xpose.msra.mxu0 0
        %497 = vmatprep.subr.bf16.mxu0 0
        %498 = vmatpush2.bf16.xpose.msra.mxu0 0
        %499 = vmatprep.subr.bf16.mxu0 0
        %500 = vmatpush2.bf16.xpose.msra.mxu0 0
        %501 = vmatprep.subr.bf16.mxu0 0
        %502 = vmatpush2.bf16.xpose.msra.mxu0 0
        %503 = vmatprep.subr.bf16.mxu0 0
        %504 = vmatpush2.bf16.xpose.msra.mxu0 0
        %505 = vmatprep.subr.bf16.mxu0 0
        %506 = vmatpush2.bf16.xpose.msra.mxu0 0
        %507 = vmatprep.mubr.bf16.mxu0 0
        %508 = vmatmul.mubr.bf16.gmra.mxu0 %v470
        %v509 = vpop.f32.mrf.mxu0
        %v510 = vadd.f32 0.0, %v509
        %v511 = vpop.f32.mrf.mxu0
        %v512 = vpop.f32.mrf.mxu0
        %v513 = vpop.f32.mrf.mxu0
        %514 = vdwg.mxu0
        %v515 = vsel %vm351, %v510, -1e+30
        %v516 = vsel %vm355, %v515, -inf
        %517 = vmax.xlane.f32.xlu0 %v516
        %v518 = vpop.xlane.xlu0 %517
        %v519 = vsub.f32 %v515, %v518
        %v520 = vmul.f32 %v519, 1.442695
        %v521 = vpow.pop %v520
        %v522 = vsel %vm355, %v521, 0.0
        %523 = vadd.xlane.f32.xlu0 %v522
        %v524 = vpop.xlane.xlu0 %523
        %v525 = vpack.c.bf16 %v521, %v521
        %526 = vrot.lane.b32.xlu0 %v346, 56
        %v527 = vpop.permute.xlu0 %526
        %v529 = vsel %vm355, %v525, 0
        %v532 = vsel %vm418, %v527, 0
        %534 = vmatprep.subr.bf16.mxu0 0
        %535 = vmatpush1.bf16.msra.mxu0 0
        %536 = vmatprep.subr.bf16.mxu0 0
        %537 = vmatpush1.bf16.msra.mxu0 0
        %538 = vmatprep.subr.bf16.mxu0 0
        %539 = vmatpush1.bf16.msra.mxu0 0
        %540 = vmatprep.subr.bf16.mxu0 0
        %541 = vmatpush1.bf16.msra.mxu0 0
        %542 = vmatprep.subr.bf16.mxu0 0
        %543 = vmatpush1.bf16.msra.mxu0 0
        %544 = vmatprep.subr.bf16.mxu0 0
        %545 = vmatpush1.bf16.msra.mxu0 0
        %546 = vmatprep.subr.bf16.mxu0 0
        %547 = vmatpush1.bf16.msra.mxu0 0
        %548 = vmatprep.subr.bf16.mxu0 0
        %549 = vmatpush1.bf16.msra.mxu0 %v532
        %550 = vmatprep.subr.bf16.mxu0 0
        %551 = vmatpush2.bf16.msra.mxu0 0
        %552 = vmatprep.subr.bf16.mxu0 0
        %553 = vmatpush2.bf16.msra.mxu0 0
        %554 = vmatprep.subr.bf16.mxu0 0
        %555 = vmatpush2.bf16.msra.mxu0 0
        %556 = vmatprep.subr.bf16.mxu0 0
        %557 = vmatpush2.bf16.msra.mxu0 0
        %558 = vmatprep.subr.bf16.mxu0 0
        %559 = vmatpush2.bf16.msra.mxu0 0
        %560 = vmatprep.subr.bf16.mxu0 0
        %561 = vmatpush2.bf16.msra.mxu0 0
        %562 = vmatprep.subr.bf16.mxu0 0
        %563 = vmatpush2.bf16.msra.mxu0 0
        %564 = vmatprep.subr.bf16.mxu0 0
        %565 = vmatpush2.bf16.msra.mxu0 0
        %566 = vmatprep.mubr.bf16.mxu0 0
        %567 = vmatmul.mubr.bf16.gmra.mxu0 %v529
        %v568 = vpop.f32.mrf.mxu0
        %v569 = vadd.f32 0.0, %v568
        %v570 = vpop.f32.mrf.mxu0
        %v571 = vpop.f32.mrf.mxu0
        %v572 = vpop.f32.mrf.mxu0
        %573 = vdwg.mxu0
        %v574 = vrcp.pop %v524
        %v575 = vmul.f32 %v569, %v574
        %v576 = vpack.c.bf16 %v575, %v575
        %577 = vrot.lane.b32.xlu0 %v346, 112
        %v578 = vpop.permute.xlu0 %577
        %579 = vrot.lane.b32.xlu0 %v346, 80
        %v580 = vpop.permute.xlu0 %579
        %v582 = vsel %vm355, %v578, 0
        %v585 = vsel %vm355, %v580, 0
        %587 = vmatprep.subr.bf16.mxu0 0
        %588 = vmatpush1.bf16.xpose.msra.mxu0 0
        %589 = vmatprep.subr.bf16.mxu0 0
        %590 = vmatpush1.bf16.xpose.msra.mxu0 0
        %591 = vmatprep.subr.bf16.mxu0 0
        %592 = vmatpush1.bf16.xpose.msra.mxu0 0
        %593 = vmatprep.subr.bf16.mxu0 0
        %594 = vmatpush1.bf16.xpose.msra.mxu0 0
        %595 = vmatprep.subr.bf16.mxu0 0
        %596 = vmatpush1.bf16.xpose.msra.mxu0 0
        %597 = vmatprep.subr.bf16.mxu0 0
        %598 = vmatpush1.bf16.xpose.msra.mxu0 0
        %599 = vmatprep.subr.bf16.mxu0 0
        %600 = vmatpush1.bf16.xpose.msra.mxu0 0
        %601 = vmatprep.subr.bf16.mxu0 0
        %602 = vmatpush1.bf16.xpose.msra.mxu0 %v585
        %603 = vmatprep.subr.bf16.mxu0 0
        %604 = vmatpush2.bf16.xpose.msra.mxu0 0
        %605 = vmatprep.subr.bf16.mxu0 0
        %606 = vmatpush2.bf16.xpose.msra.mxu0 0
        %607 = vmatprep.subr.bf16.mxu0 0
        %608 = vmatpush2.bf16.xpose.msra.mxu0 0
        %609 = vmatprep.subr.bf16.mxu0 0
        %610 = vmatpush2.bf16.xpose.msra.mxu0 0
        %611 = vmatprep.subr.bf16.mxu0 0
        %612 = vmatpush2.bf16.xpose.msra.mxu0 0
        %613 = vmatprep.subr.bf16.mxu0 0
        %614 = vmatpush2.bf16.xpose.msra.mxu0 0
        %615 = vmatprep.subr.bf16.mxu0 0
        %616 = vmatpush2.bf16.xpose.msra.mxu0 0
        %617 = vmatprep.subr.bf16.mxu0 0
        %618 = vmatpush2.bf16.xpose.msra.mxu0 0
        %619 = vmatprep.mubr.bf16.mxu0 0
        %620 = vmatmul.mubr.bf16.gmra.mxu0 %v582
        %v621 = vpop.f32.mrf.mxu0
        %v622 = vadd.f32 0.0, %v621
        %v623 = vpop.f32.mrf.mxu0
        %v624 = vpop.f32.mrf.mxu0
        %v625 = vpop.f32.mrf.mxu0
        %626 = vdwg.mxu0
        %v627 = vsel %vm351, %v622, -1e+30
        %v628 = vsel %vm355, %v627, -inf
        %629 = vmax.xlane.f32.xlu0 %v628
        %v630 = vpop.xlane.xlu0 %629
        %v631 = vsub.f32 %v627, %v630
        %v632 = vmul.f32 %v631, 1.442695
        %v633 = vpow.pop %v632
        %v634 = vsel %vm355, %v633, 0.0
        %635 = vadd.xlane.f32.xlu0 %v634
        %v636 = vpop.xlane.xlu0 %635
        %v637 = vpack.c.bf16 %v633, %v633
        %638 = vrot.lane.b32.xlu0 %v346, 48
        %v639 = vpop.permute.xlu0 %638
        %v641 = vsel %vm355, %v637, 0
        %v644 = vsel %vm418, %v639, 0
        %646 = vmatprep.subr.bf16.mxu0 0
        %647 = vmatpush1.bf16.msra.mxu0 0
        %648 = vmatprep.subr.bf16.mxu0 0
        %649 = vmatpush1.bf16.msra.mxu0 0
        %650 = vmatprep.subr.bf16.mxu0 0
        %651 = vmatpush1.bf16.msra.mxu0 0
        %652 = vmatprep.subr.bf16.mxu0 0
        %653 = vmatpush1.bf16.msra.mxu0 0
        %654 = vmatprep.subr.bf16.mxu0 0
        %655 = vmatpush1.bf16.msra.mxu0 0
        %656 = vmatprep.subr.bf16.mxu0 0
        %657 = vmatpush1.bf16.msra.mxu0 0
        %658 = vmatprep.subr.bf16.mxu0 0
        %659 = vmatpush1.bf16.msra.mxu0 0
        %660 = vmatprep.subr.bf16.mxu0 0
        %661 = vmatpush1.bf16.msra.mxu0 %v644
        %662 = vmatprep.subr.bf16.mxu0 0
        %663 = vmatpush2.bf16.msra.mxu0 0
        %664 = vmatprep.subr.bf16.mxu0 0
        %665 = vmatpush2.bf16.msra.mxu0 0
        %666 = vmatprep.subr.bf16.mxu0 0
        %667 = vmatpush2.bf16.msra.mxu0 0
        %668 = vmatprep.subr.bf16.mxu0 0
        %669 = vmatpush2.bf16.msra.mxu0 0
        %670 = vmatprep.subr.bf16.mxu0 0
        %671 = vmatpush2.bf16.msra.mxu0 0
        %672 = vmatprep.subr.bf16.mxu0 0
        %673 = vmatpush2.bf16.msra.mxu0 0
        %674 = vmatprep.subr.bf16.mxu0 0
        %675 = vmatpush2.bf16.msra.mxu0 0
        %676 = vmatprep.subr.bf16.mxu0 0
        %677 = vmatpush2.bf16.msra.mxu0 0
        %678 = vmatprep.mubr.bf16.mxu0 0
        %679 = vmatmul.mubr.bf16.gmra.mxu0 %v641
        %v680 = vpop.f32.mrf.mxu0
        %v681 = vadd.f32 0.0, %v680
        %v682 = vpop.f32.mrf.mxu0
        %v683 = vpop.f32.mrf.mxu0
        %v684 = vpop.f32.mrf.mxu0
        %685 = vdwg.mxu0
        %v686 = vrcp.pop %v636
        %v687 = vmul.f32 %v681, %v686
        %v688 = vpack.c.bf16 %v687, %v687
        %689 = vrot.lane.b32.xlu0 %v346, 104
        %v690 = vpop.permute.xlu0 %689
        %691 = vrot.lane.b32.xlu0 %v346, 72
        %v692 = vpop.permute.xlu0 %691
        %v694 = vsel %vm355, %v690, 0
        %v697 = vsel %vm355, %v692, 0
        %699 = vmatprep.subr.bf16.mxu0 0
        %700 = vmatpush1.bf16.xpose.msra.mxu0 0
        %701 = vmatprep.subr.bf16.mxu0 0
        %702 = vmatpush1.bf16.xpose.msra.mxu0 0
        %703 = vmatprep.subr.bf16.mxu0 0
        %704 = vmatpush1.bf16.xpose.msra.mxu0 0
        %705 = vmatprep.subr.bf16.mxu0 0
        %706 = vmatpush1.bf16.xpose.msra.mxu0 0
        %707 = vmatprep.subr.bf16.mxu0 0
        %708 = vmatpush1.bf16.xpose.msra.mxu0 0
        %709 = vmatprep.subr.bf16.mxu0 0
        %710 = vmatpush1.bf16.xpose.msra.mxu0 0
        %711 = vmatprep.subr.bf16.mxu0 0
        %712 = vmatpush1.bf16.xpose.msra.mxu0 0
        %713 = vmatprep.subr.bf16.mxu0 0
        %714 = vmatpush1.bf16.xpose.msra.mxu0 %v697
        %715 = vmatprep.subr.bf16.mxu0 0
        %716 = vmatpush2.bf16.xpose.msra.mxu0 0
        %717 = vmatprep.subr.bf16.mxu0 0
        %718 = vmatpush2.bf16.xpose.msra.mxu0 0
        %719 = vmatprep.subr.bf16.mxu0 0
        %720 = vmatpush2.bf16.xpose.msra.mxu0 0
        %721 = vmatprep.subr.bf16.mxu0 0
        %722 = vmatpush2.bf16.xpose.msra.mxu0 0
        %723 = vmatprep.subr.bf16.mxu0 0
        %724 = vmatpush2.bf16.xpose.msra.mxu0 0
        %725 = vmatprep.subr.bf16.mxu0 0
        %726 = vmatpush2.bf16.xpose.msra.mxu0 0
        %727 = vmatprep.subr.bf16.mxu0 0
        %728 = vmatpush2.bf16.xpose.msra.mxu0 0
        %729 = vmatprep.subr.bf16.mxu0 0
        %730 = vmatpush2.bf16.xpose.msra.mxu0 0
        %731 = vmatprep.mubr.bf16.mxu0 0
        %732 = vmatmul.mubr.bf16.gmra.mxu0 %v694
        %v733 = vpop.f32.mrf.mxu0
        %v734 = vadd.f32 0.0, %v733
        %v735 = vpop.f32.mrf.mxu0
        %v736 = vpop.f32.mrf.mxu0
        %v737 = vpop.f32.mrf.mxu0
        %738 = vdwg.mxu0
        %v739 = vsel %vm351, %v734, -1e+30
        %v740 = vsel %vm355, %v739, -inf
        %741 = vmax.xlane.f32.xlu0 %v740
        %v742 = vpop.xlane.xlu0 %741
        %v743 = vsub.f32 %v739, %v742
        %v744 = vmul.f32 %v743, 1.442695
        %v745 = vpow.pop %v744
        %v746 = vsel %vm355, %v745, 0.0
        %747 = vadd.xlane.f32.xlu0 %v746
        %v748 = vpop.xlane.xlu0 %747
        %v749 = vpack.c.bf16 %v745, %v745
        %750 = vrot.lane.b32.xlu0 %v346, 40
        %v751 = vpop.permute.xlu0 %750
        %v753 = vsel %vm355, %v749, 0
        %v756 = vsel %vm418, %v751, 0
        %758 = vmatprep.subr.bf16.mxu0 0
        %759 = vmatpush1.bf16.msra.mxu0 0
        %760 = vmatprep.subr.bf16.mxu0 0
        %761 = vmatpush1.bf16.msra.mxu0 0
        %762 = vmatprep.subr.bf16.mxu0 0
        %763 = vmatpush1.bf16.msra.mxu0 0
        %764 = vmatprep.subr.bf16.mxu0 0
        %765 = vmatpush1.bf16.msra.mxu0 0
        %766 = vmatprep.subr.bf16.mxu0 0
        %767 = vmatpush1.bf16.msra.mxu0 0
        %768 = vmatprep.subr.bf16.mxu0 0
        %769 = vmatpush1.bf16.msra.mxu0 0
        %770 = vmatprep.subr.bf16.mxu0 0
        %771 = vmatpush1.bf16.msra.mxu0 0
        %772 = vmatprep.subr.bf16.mxu0 0
        %773 = vmatpush1.bf16.msra.mxu0 %v756
        %774 = vmatprep.subr.bf16.mxu0 0
        %775 = vmatpush2.bf16.msra.mxu0 0
        %776 = vmatprep.subr.bf16.mxu0 0
        %777 = vmatpush2.bf16.msra.mxu0 0
        %778 = vmatprep.subr.bf16.mxu0 0
        %779 = vmatpush2.bf16.msra.mxu0 0
        %780 = vmatprep.subr.bf16.mxu0 0
        %781 = vmatpush2.bf16.msra.mxu0 0
        %782 = vmatprep.subr.bf16.mxu0 0
        %783 = vmatpush2.bf16.msra.mxu0 0
        %784 = vmatprep.subr.bf16.mxu0 0
        %785 = vmatpush2.bf16.msra.mxu0 0
        %786 = vmatprep.subr.bf16.mxu0 0
        %787 = vmatpush2.bf16.msra.mxu0 0
        %788 = vmatprep.subr.bf16.mxu0 0
        %789 = vmatpush2.bf16.msra.mxu0 0
        %790 = vmatprep.mubr.bf16.mxu0 0
        %791 = vmatmul.mubr.bf16.gmra.mxu0 %v753
        %v792 = vpop.f32.mrf.mxu0
        %v793 = vadd.f32 0.0, %v792
        %v794 = vpop.f32.mrf.mxu0
        %v795 = vpop.f32.mrf.mxu0
        %v796 = vpop.f32.mrf.mxu0
        %797 = vdwg.mxu0
        %v798 = vrcp.pop %v748
        %v799 = vmul.f32 %v793, %v798
        %v800 = vpack.c.bf16 %v799, %v799
        %802 = vrot.lane.b32.xlu0 %v576, 8
        %v803 = vpop.permute.xlu0 %802
        %805 = vrot.lane.b32.xlu0 %v688, 16
        %v806 = vpop.permute.xlu0 %805
        %808 = vrot.lane.b32.xlu0 %v800, 24
        %v809 = vpop.permute.xlu0 %808
        %v812 = vsel %vm355, %v464, %v803
        %vm813 = vcmask 130048
        %v815 = vsel %vm813, %v812, %v806
        %vm816 = vcmask 195584
        %v818 = vsel %vm816, %v815, %v809
        %v819 = vld [vmem:[%s2] sm:$0xf]
        %v820 = vld [vmem:[%s2 + $0x4] sm:$0xf]
        %v821 = vld [vmem:[%s2 + $0x8] sm:$0xf]
        %v822 = vld [vmem:[%s2 + $0xc] sm:$0xf]
        %v823 = vlaneseq
        %v824 = vshrl.u32 %v823, 7
        %v825 = vsub.s32 0, %v824
        %v826 = vrot.slane %v251, %v825
        %v831 = vunpack.c.l.b16 %v819
        %v832 = vunpack.c.l.b16 %v820
        %v833 = vunpack.c.l.b16 %v821
        %v834 = vunpack.c.l.b16 %v822
        %v835 = vpack.c.b16 %v832, %v831
        %v836 = vpack.c.b16 %v834, %v833
        %v839 = vsel %vm257, %v818, 0
        %841 = vmatprep.subr.bf16.mxu0 0
        %842 = vmatpush1.bf16.msra.mxu0 0
        %843 = vmatprep.subr.bf16.mxu0 0
        %844 = vmatpush1.bf16.msra.mxu0 0
        %845 = vmatprep.subr.bf16.mxu0 0
        %846 = vmatpush1.bf16.msra.mxu0 0
        %847 = vmatprep.subr.bf16.mxu0 0
        %848 = vmatpush1.bf16.msra.mxu0 0
        %849 = vmatprep.subr.bf16.mxu0 0
        %850 = vmatpush1.bf16.msra.mxu0 0
        %851 = vmatprep.subr.bf16.mxu0 0
        %852 = vmatpush1.bf16.msra.mxu0 0
        %853 = vmatprep.subr.bf16.mxu0 0
        %854 = vmatpush1.bf16.msra.mxu0 %v836
        %855 = vmatprep.subr.bf16.mxu0 0
        %856 = vmatpush1.bf16.msra.mxu0 %v835
        %857 = vmatprep.subr.bf16.mxu0 0
        %858 = vmatpush2.bf16.msra.mxu0 0
        %859 = vmatprep.subr.bf16.mxu0 0
        %860 = vmatpush2.bf16.msra.mxu0 0
        %861 = vmatprep.subr.bf16.mxu0 0
        %862 = vmatpush2.bf16.msra.mxu0 0
        %863 = vmatprep.subr.bf16.mxu0 0
        %864 = vmatpush2.bf16.msra.mxu0 0
        %865 = vmatprep.subr.bf16.mxu0 0
        %866 = vmatpush2.bf16.msra.mxu0 0
        %867 = vmatprep.subr.bf16.mxu0 0
        %868 = vmatpush2.bf16.msra.mxu0 0
        %869 = vmatprep.subr.bf16.mxu0 0
        %870 = vmatpush2.bf16.msra.mxu0 0
        %871 = vmatprep.subr.bf16.mxu0 0
        %872 = vmatpush2.bf16.msra.mxu0 0
        %873 = vmatprep.mubr.bf16.mxu0 0
        %874 = vmatmul.mubr.bf16.gmra.mxu0 %v839
        %v875 = vpop.f32.mrf.mxu0
        %v876 = vadd.f32 %v826, %v875
        %v877 = vpop.f32.mrf.mxu0
        %v878 = vpop.f32.mrf.mxu0
        %v879 = vpop.f32.mrf.mxu0
        %880 = vdwg.mxu0
        %v881 = vadd.f32 %v876, %v248
        %v882 = vsel %vm257, %v881, 0.0
        %883 = vadd.xlane.f32.xlu0 %v882
        %v884 = vpop.xlane.xlu0 %883
        %v885 = vmul.f32 %v884, %v261
        %v886 = vsub.f32 %v881, %v885
        %v887 = vmul.f32 %v886, %v886
        %v888 = vsel %vm257, %v887, 0.0
        %889 = vadd.xlane.f32.xlu0 %v888
        %v890 = vpop.xlane.xlu0 %889
        %v891 = vmul.f32 %v890, %v261
        %v892 = vadd.f32 %v891, 1e-05
        %v893 = vrsqrt.pop %v892
        %v894 = vmul.f32 %v886, %v893
        %v895 = vlaneseq
        %v896 = vshrl.u32 %v895, 7
        %v897 = vsub.s32 0, %v896
        %v898 = vrot.slane %v252, %v897
        %v899 = vmul.f32 %v894, %v898
        %v900 = vlaneseq
        %v901 = vshrl.u32 %v900, 7
        %v902 = vsub.s32 0, %v901
        %v903 = vrot.slane %v253, %v902
        %v904 = vadd.f32 %v899, %v903
        %v905 = vpack.c.bf16 %v904, %v904
        %v906 = vld [vmem:[%s3] sm:$0xf]
        %v907 = vld [vmem:[%s3 + $0x4] sm:$0xf]
        %v908 = vld [vmem:[%s3 + $0x8] sm:$0xf]
        %v909 = vld [vmem:[%s3 + $0xc] sm:$0xf]
        %v910 = vlaneseq
        %v911 = vshrl.u32 %v910, 7
        %v912 = vsub.s32 0, %v911
        %v913 = vrot.slane %v255, %v912
        %v918 = vunpack.c.l.b16 %v906
        %v919 = vunpack.c.l.b16 %v907
        %v920 = vunpack.c.l.b16 %v908
        %v921 = vunpack.c.l.b16 %v909
        %v922 = vpack.c.b16 %v919, %v918
        %v923 = vpack.c.b16 %v921, %v920
        %v927 = vsel %vm257, %v905, 0
        %929 = vmatprep.subr.bf16.mxu0 0
        %930 = vmatpush1.bf16.msra.mxu0 0
        %931 = vmatprep.subr.bf16.mxu0 0
        %932 = vmatpush1.bf16.msra.mxu0 0
        %933 = vmatprep.subr.bf16.mxu0 0
        %934 = vmatpush1.bf16.msra.mxu0 0
        %935 = vmatprep.subr.bf16.mxu0 0
        %936 = vmatpush1.bf16.msra.mxu0 0
        %937 = vmatprep.subr.bf16.mxu0 0
        %938 = vmatpush1.bf16.msra.mxu0 0
        %939 = vmatprep.subr.bf16.mxu0 0
        %940 = vmatpush1.bf16.msra.mxu0 0
        %941 = vmatprep.subr.bf16.mxu0 0
        %942 = vmatpush1.bf16.msra.mxu0 %v923
        %943 = vmatprep.subr.bf16.mxu0 0
        %944 = vmatpush1.bf16.msra.mxu0 %v922
        %945 = vmatprep.subr.bf16.mxu0 0
        %946 = vmatpush2.bf16.msra.mxu0 0
        %947 = vmatprep.subr.bf16.mxu0 0
        %948 = vmatpush2.bf16.msra.mxu0 0
        %949 = vmatprep.subr.bf16.mxu0 0
        %950 = vmatpush2.bf16.msra.mxu0 0
        %951 = vmatprep.subr.bf16.mxu0 0
        %952 = vmatpush2.bf16.msra.mxu0 0
        %953 = vmatprep.subr.bf16.mxu0 0
        %954 = vmatpush2.bf16.msra.mxu0 0
        %955 = vmatprep.subr.bf16.mxu0 0
        %956 = vmatpush2.bf16.msra.mxu0 0
        %957 = vmatprep.subr.bf16.mxu0 0
        %958 = vmatpush2.bf16.msra.mxu0 0
        %959 = vmatprep.subr.bf16.mxu0 0
        %960 = vmatpush2.bf16.msra.mxu0 0
        %961 = vmatprep.mubr.bf16.mxu0 0
        %962 = vmatmul.mubr.bf16.gmra.mxu0 %v927
        %v963 = vpop.f32.mrf.mxu0
        %v964 = vadd.f32 %v913, %v963
        %v965 = vpop.f32.mrf.mxu0
        %v966 = vpop.f32.mrf.mxu0
        %v967 = vpop.f32.mrf.mxu0
        %968 = vdwg.mxu0
        %v969 = vmul.f32 %v964, 1.702
        %v970 = vxor.u32 %v969, 2147483648
        %v971 = vmul.f32 %v970, 1.442695
        %v972 = vpow.pop %v971
        %v973 = vadd.f32 %v972, 1.0
        %v974 = vrcp.pop %v973
        %v975 = vmul.f32 1.0, %v974
        %v976 = vmul.f32 %v964, %v975
        %v977 = vpack.c.bf16 %v976, %v976
        %v978 = vld [vmem:[%s4] sm:$0xf]
        %v979 = vld [vmem:[%s4 + $0x4] sm:$0xf]
        %v980 = vld [vmem:[%s4 + $0x8] sm:$0xf]
        %v981 = vld [vmem:[%s4 + $0xc] sm:$0xf]
        %v982 = vld [vmem:[%s4 + $0x10] sm:$0xf]
        %v983 = vld [vmem:[%s4 + $0x14] sm:$0xf]
        %v984 = vld [vmem:[%s4 + $0x18] sm:$0xf]
        %v985 = vld [vmem:[%s4 + $0x1c] sm:$0xf]
        %v986 = vld [vmem:[%s4 + $0x20] sm:$0xf]
        %v987 = vld [vmem:[%s4 + $0x24] sm:$0xf]
        %v988 = vld [vmem:[%s4 + $0x28] sm:$0xf]
        %v989 = vld [vmem:[%s4 + $0x2c] sm:$0xf]
        %v990 = vld [vmem:[%s4 + $0x30] sm:$0xf]
        %v991 = vld [vmem:[%s4 + $0x34] sm:$0xf]
        %v992 = vld [vmem:[%s4 + $0x38] sm:$0xf]
        %v993 = vld [vmem:[%s4 + $0x3c] sm:$0xf]
        %v994 = vlaneseq
        %v995 = vshrl.u32 %v994, 7
        %v996 = vsub.s32 0, %v995
        %v997 = vrot.slane %v254, %v996
        %v1014 = vunpack.c.l.b16 %v978
        %v1015 = vunpack.c.l.b16 %v979
        %v1016 = vunpack.c.l.b16 %v980
        %v1017 = vunpack.c.l.b16 %v981
        %v1018 = vunpack.c.l.b16 %v982
        %v1019 = vunpack.c.l.b16 %v983
        %v1020 = vunpack.c.l.b16 %v984
        %v1021 = vunpack.c.l.b16 %v985
        %v1022 = vunpack.c.l.b16 %v986
        %v1023 = vunpack.c.l.b16 %v987
        %v1024 = vunpack.c.l.b16 %v988
        %v1025 = vunpack.c.l.b16 %v989
        %v1026 = vunpack.c.l.b16 %v990
        %v1027 = vunpack.c.l.b16 %v991
        %v1028 = vunpack.c.l.b16 %v992
        %v1029 = vunpack.c.l.b16 %v993
        %v1030 = vpack.c.b16 %v1015, %v1014
        %v1031 = vpack.c.b16 %v1017, %v1016
        %v1032 = vpack.c.b16 %v1019, %v1018
        %v1033 = vpack.c.b16 %v1021, %v1020
        %v1034 = vpack.c.b16 %v1023, %v1022
        %v1035 = vpack.c.b16 %v1025, %v1024
        %v1036 = vpack.c.b16 %v1027, %v1026
        %v1037 = vpack.c.b16 %v1029, %v1028
        %1046 = vmatprep.subr.bf16.mxu0 0
        %1047 = vmatpush1.bf16.msra.mxu0 %v1037
        %1048 = vmatprep.subr.bf16.mxu0 0
        %1049 = vmatpush1.bf16.msra.mxu0 %v1036
        %1050 = vmatprep.subr.bf16.mxu0 0
        %1051 = vmatpush1.bf16.msra.mxu0 %v1035
        %1052 = vmatprep.subr.bf16.mxu0 0
        %1053 = vmatpush1.bf16.msra.mxu0 %v1034
        %1054 = vmatprep.subr.bf16.mxu0 0
        %1055 = vmatpush1.bf16.msra.mxu0 %v1033
        %1056 = vmatprep.subr.bf16.mxu0 0
        %1057 = vmatpush1.bf16.msra.mxu0 %v1032
        %1058 = vmatprep.subr.bf16.mxu0 0
        %1059 = vmatpush1.bf16.msra.mxu0 %v1031
        %1060 = vmatprep.subr.bf16.mxu0 0
        %1061 = vmatpush1.bf16.msra.mxu0 %v1030
        %1062 = vmatprep.subr.bf16.mxu0 0
        %1063 = vmatpush2.bf16.msra.mxu0 0
        %1064 = vmatprep.subr.bf16.mxu0 0
        %1065 = vmatpush2.bf16.msra.mxu0 0
        %1066 = vmatprep.subr.bf16.mxu0 0
        %1067 = vmatpush2.bf16.msra.mxu0 0
        %1068 = vmatprep.subr.bf16.mxu0 0
        %1069 = vmatpush2.bf16.msra.mxu0 0
        %1070 = vmatprep.subr.bf16.mxu0 0
        %1071 = vmatpush2.bf16.msra.mxu0 0
        %1072 = vmatprep.subr.bf16.mxu0 0
        %1073 = vmatpush2.bf16.msra.mxu0 0
        %1074 = vmatprep.subr.bf16.mxu0 0
        %1075 = vmatpush2.bf16.msra.mxu0 0
        %1076 = vmatprep.subr.bf16.mxu0 0
        %1077 = vmatpush2.bf16.msra.mxu0 0
        %1078 = vmatprep.mubr.bf16.mxu0 0
        %1079 = vmatmul.mubr.bf16.gmra.mxu0 %v977
        %v1080 = vpop.f32.mrf.mxu0
        %v1081 = vadd.f32 %v997, %v1080
        %v1082 = vpop.f32.mrf.mxu0
        %v1083 = vpop.f32.mrf.mxu0
        %v1084 = vpop.f32.mrf.mxu0
        %1085 = vdwg.mxu0
        %v1086 = vadd.f32 %v1081, %v881
        %1087 = vst.msk [vmem:[%s242] sm:$0xff] %vm257, %v1086
        %s1088 = sand.u32 %s159, 1
        %s1089 = scalar_lea.sflag [#allocation3], %s1088
        %s1090 = sand.u32 %s159, 1
        %s1091 = smul.addr %s1090, 8
        %s1092 = scalar_lea.vmem [#allocation2], %s1091
        // Predicated region
        $region45: #{tpu_custom_call.1} parent=43 // pred_check
          %p1093 = pneg %p169
        $region46: #{tpu_custom_call.1} parent=43 // pred_check_branch
          %1095 = sbr.rel (%p1093) target = $region48
        $region47: #{tpu_custom_call.1} parent=43 // pred_region
          %s1097 = ssub.s32 128, 128
          %1098 = vsyncadd %s1089, %s1097
          %s1099 = smul.addr %s20, 128
          %s1100 = scalar_lea.hbm %s6, %s1099
          %s1102 = sshll.u32 %s1092, 4
          %s1103 = int_to_ptr.vmem [resolvable:$true] %s1102
          %1105 = dma.vmem_to_hbm [thread:$0]  %s1103, 128, %s1100, %s1089
        $region48: #{tpu_custom_call.1} parent=43 // pred_fallthru
          _
      $region44: #{tpu_custom_call.1} parent=5 // pred_fallthru
        _
      %p1106 = scmp.le.s32.totalorder 2, %s15
      // Predicated region
      $region49: #{tpu_custom_call.1} parent=5 // pred_check
        %p1107 = pneg %p1106
      $region50: #{tpu_custom_call.1} parent=5 // pred_check_branch
        %1109 = sbr.rel (%p1107) target = $region52
      $region51: #{tpu_custom_call.1} parent=5 // pred_region
        %s1110 = ssub.s32 %s15, 2
        // Predicated region
        $region53: #{tpu_custom_call.1} parent=51 // pred_check
          %p1111 = pneg %p175
        $region54: #{tpu_custom_call.1} parent=51 // pred_check_branch
          %1113 = sbr.rel (%p1111) target = $region56
        $region55: #{tpu_custom_call.1} parent=51 // pred_region
          %s1114 = sand.u32 %s160, 1
          %s1115 = scalar_lea.sflag [#allocation3], %s1114
          %s1116 = sand.u32 %s160, 1
          %s1117 = smul.addr %s1116, 8
          %s1118 = scalar_lea.vmem [#allocation2], %s1117
          %1119 = dma.done %s1115, 128
        $region56: #{tpu_custom_call.1} parent=51 // pred_fallthru
          _
      $region52: #{tpu_custom_call.1} parent=5 // pred_fallthru
        _
    $region6: #{tpu_custom_call.1} parent=1 // loop_footer
      %s19 = sadd.s32 1, %s15
    $region7: #{tpu_custom_call.1} parent=1 // loop_footer_branch
      %14 = sbr.rel target = $region3
    $region8: #{tpu_custom_call.1} parent=1 // loop_exit
      _
    %1120 = vsyncpa [#allocation3], 1
    %s1121 = scalar_lea.sflag [#allocation3], 1
    %1122 = vsyncpa %s1121, 1

</llo_original>
